<compile_context>
chip_gen: v7x
topology: tpu7x:2x2x1
jax: 0.10.0
libtpu: 0.0.40
codegen_flags: <defaults>
</compile_context>

<pallas_src>
import functools

import jax
import jax.numpy as jnp
from jax.experimental import pallas as pl
from jax.experimental.pallas import tpu as pltpu


# ----------------------------------------------------------------------------
# Kernel 1: spectral norm (power iteration + sigma) -- everything in VMEM
# ----------------------------------------------------------------------------
def _spectral_sigma_kernel(w_ref, wt_ref, u_ref, v_ref,
                           u_out, v_out, inv_out, *,
                           training, power_iterations, eps):
    """w_ref: (height,width)  wt_ref: (width,height)  u: (1,height)  v: (1,width)."""
    u = u_ref[...]
    v = v_ref[...]
    if training:
        for _ in range(power_iterations):   # static unroll (default: 1)
            # v <- l2normalize(W^T u)  (row-vector form: u @ W)
            wv = jnp.dot(u, w_ref[...], preferred_element_type=jnp.float32)
            v = wv / (jnp.sqrt(jnp.sum(wv * wv)) + eps)
            # u <- l2normalize(W v)    (row-vector form: v @ W^T)
            wu = jnp.dot(v, wt_ref[...], preferred_element_type=jnp.float32)
            u = wu / (jnp.sqrt(jnp.sum(wu * wu)) + eps)
    # sigma = u . (W v)
    wv_h = jnp.dot(v, wt_ref[...], preferred_element_type=jnp.float32)  # (1, height)
    sigma = jnp.sum(u * wv_h)
    u_out[...] = u
    v_out[...] = v
    inv_out[...] = jnp.broadcast_to(1.0 / sigma, (1, 1))


def spectral_sigma(w2d, w2d_t, u_row, v_row, *, training, power_iterations):
    height, width = w2d.shape
    kern = functools.partial(_spectral_sigma_kernel, training=training,
                             power_iterations=power_iterations, eps=1e-12)
    return pl.pallas_call(
        kern,
        out_shape=(jax.ShapeDtypeStruct((1, height), jnp.float32),
                   jax.ShapeDtypeStruct((1, width), jnp.float32),
                   jax.ShapeDtypeStruct((1, 1), jnp.float32)),
        grid_spec=pltpu.PrefetchScalarGridSpec(
            num_scalar_prefetch=0,
            grid=(1,),
            in_specs=[
                pl.BlockSpec((height, width), lambda i: (0, 0)),
                pl.BlockSpec((width, height), lambda i: (0, 0)),
                pl.BlockSpec((1, height), lambda i: (0, 0)),
                pl.BlockSpec((1, width), lambda i: (0, 0)),
            ],
            out_specs=(
                pl.BlockSpec((1, height), lambda i: (0, 0)),
                pl.BlockSpec((1, width), lambda i: (0, 0)),
                pl.BlockSpec((1, 1), lambda i: (0, 0)),
            ),
        ),
        compiler_params=pltpu.CompilerParams(
            dimension_semantics=("arbitrary",)),
    )(w2d, w2d_t, u_row, v_row)


# ----------------------------------------------------------------------------
# Kernel 2: wrapped Conv2d as one im2col GEMM per batch, fused 1/sigma + bias
# ----------------------------------------------------------------------------
def _sn_conv_kernel(xp_ref, w_ref, inv_ref, b_ref, o_ref, patches_ref, *, kh, kw):
    """xp_ref: (1,Hp,Wp,Cin) padded NHWC, w_ref: (kh*kw*Cin, Cout),
    inv_ref: (1,1) = 1/sigma, b_ref: (1,Cout), o_ref: (1,H*W,Cout),
    patches_ref: VMEM scratch (H, W, kh*kw*Cin)."""
    Hp, Wp, Cin = xp_ref.shape[1], xp_ref.shape[2], xp_ref.shape[3]
    H, W = Hp - (kh - 1), Wp - (kw - 1)
    K, Cout = w_ref.shape

    # im2col: fold all taps into the contraction dim (single GEMM, K = kh*kw*Cin)
    for dh in range(kh):                         # static tap loop -> plain stores
        for dw in range(kw):
            c0 = (dh * kw + dw) * Cin
            patches_ref[:, :, c0:c0 + Cin] = xp_ref[0, dh:dh + H, dw:dw + W, :]

    patches = patches_ref[...].reshape(H * W, K)
    y = jnp.dot(patches, w_ref[...], preferred_element_type=jnp.float32)
    # fused epilogue: spectral normalization (scale by 1/sigma) then conv bias
    y = y * inv_ref[0, 0] + b_ref[0, :]
    o_ref[...] = y.reshape(o_ref.shape).astype(o_ref.dtype)


def sn_conv2d_same(xp, w_mat, inv_sigma, bias_row, *, H, W, kh, kw):
    N, Hp, Wp, Cin = xp.shape
    K, Cout = w_mat.shape
    kern = functools.partial(_sn_conv_kernel, kh=kh, kw=kw)
    return pl.pallas_call(
        kern,
        out_shape=jax.ShapeDtypeStruct((N, H * W, Cout), jnp.float32),
        grid_spec=pltpu.PrefetchScalarGridSpec(
            num_scalar_prefetch=0,
            grid=(N,),
            in_specs=[
                pl.BlockSpec((1, Hp, Wp, Cin), lambda n: (n, 0, 0, 0)),
                pl.BlockSpec((K, Cout), lambda n: (0, 0)),      # constant -> resident
                pl.BlockSpec((1, 1), lambda n: (0, 0)),
                pl.BlockSpec((1, Cout), lambda n: (0, 0)),
            ],
            out_specs=pl.BlockSpec((1, H * W, Cout), lambda n: (n, 0, 0)),
            scratch_shapes=[pltpu.VMEM((H, W, K), jnp.float32)],
        ),
        compiler_params=pltpu.CompilerParams(
            dimension_semantics=("parallel",)),                 # megacore on v7x
    )(xp, w_mat, inv_sigma, bias_row)


# ----------------------------------------------------------------------------
# Forward pass glue (PyTorch NCHW boundary handled once)
# ----------------------------------------------------------------------------
def spectral_norm_conv2d_forward(params, x_nchw, *, training=True,
                                 power_iterations=1):
    w_bar = params["w_bar"]                       # (Cout, Cin, kh, kw)  OIHW
    bias = params["bias"]                         # (Cout,)
    u, v = params["u"], params["v"]               # (Cout,), (Cin*kh*kw,)
    Cout, Cin, kh, kw = w_bar.shape
    height, width = Cout, Cin * kh * kw

    # --- spectral norm: power iteration + sigma (one Pallas call) ---
    w2d = w_bar.reshape(height, width)            # == torch w.view(height, -1)
    w2d_t = jnp.transpose(w2d)
    u_row, v_row, inv_sigma = spectral_sigma(
        w2d, w2d_t, u.reshape(1, height), v.reshape(1, width),
        training=training, power_iterations=power_iterations)

    # --- wrapped module forward: Conv2d(k x k, stride 1, 'same') ---
    # weight reordered once for the im2col GEMM: (kh, kw, cin) x cout
    w_mat = jnp.transpose(w_bar, (2, 3, 1, 0)).reshape(kh * kw * Cin, Cout)
    x_nhwc = jnp.transpose(x_nchw, (0, 2, 3, 1))  # layout converted once
    ph, pw = (kh - 1) // 2, (kw - 1) // 2
    xp = jnp.pad(x_nhwc, ((0, 0), (ph, ph), (pw, pw), (0, 0)))  # padded once
    N, H, W = x_nhwc.shape[0], x_nhwc.shape[1], x_nhwc.shape[2]

    y = sn_conv2d_same(xp, w_mat, inv_sigma, bias.reshape(1, Cout),
                       H=H, W=W, kh=kh, kw=kw)
    y_nchw = jnp.transpose(y.reshape(N, H, W, Cout), (0, 3, 1, 2))
    return y_nchw, u_row.reshape(height), v_row.reshape(width)


# ----------------------------------------------------------------------------
# Pure-JAX reference for correctness checking
# ----------------------------------------------------------------------------
def _l2normalize(x, eps=1e-12):
    return x / (jnp.linalg.norm(x) + eps)


def reference_forward(params, x_nchw, *, training=True, power_iterations=1):
    w_bar, bias, u, v = (params["w_bar"], params["bias"],
                         params["u"], params["v"])
    Cout, Cin, kh, kw = w_bar.shape
    w2d = w_bar.reshape(Cout, -1)
    if training:
        for _ in range(power_iterations):
            v = _l2normalize(w2d.T @ u)
            u = _l2normalize(w2d @ v)
    sigma = jnp.dot(u, w2d @ v)
    w_n = w_bar / sigma
    ph, pw = (kh - 1) // 2, (kw - 1) // 2
    y = jax.lax.conv_general_dilated(
        x_nchw, w_n, window_strides=(1, 1),
        padding=((ph, ph), (pw, pw)),
        dimension_numbers=("NCHW", "OIHW", "NCHW"))
    y = y + bias.reshape(1, Cout, 1, 1)
    return y, u, v


# ----------------------------------------------------------------------------
if __name__ == "__main__":
    N, Cin, H, W = 2, 4, 16, 16          # x (PyTorch view): NCHW = (2, 4, 16, 16)
    Cout, kh, kw = 128, 3, 3             # wrapped module: nn.Conv2d(4, 128, 3, padding=1)

    key = jax.random.PRNGKey(0)
    kx, kwt, kb, ku, kv = jax.random.split(key, 5)
    x = jax.random.normal(kx, (N, Cin, H, W), jnp.float32)
    w_bar = jax.random.normal(kwt, (Cout, Cin, kh, kw), jnp.float32) * 0.05
    bias = jax.random.normal(kb, (Cout,), jnp.float32) * 0.05
    height, width = Cout, Cin * kh * kw
    params = {
        "w_bar": w_bar,
        "bias": bias,
        "u": _l2normalize(jax.random.normal(ku, (height,), jnp.float32)),
        "v": _l2normalize(jax.random.normal(kv, (width,), jnp.float32)),
    }

    tol = dict(rtol=2e-2, atol=2e-2)
    for training in (True, False):        # _update_u_v and _noupdate_u_v paths
        fwd = jax.jit(functools.partial(spectral_norm_conv2d_forward,
                                        training=training, power_iterations=1))
        y, u_new, v_new = fwd(params, x)
        y = jax.block_until_ready(y)

        y_ref, u_ref, v_ref = reference_forward(params, x, training=training,
                                                power_iterations=1)
        for name, got, ref in (("y", y, y_ref), ("u", u_new, u_ref),
                               ("v", v_new, v_ref)):
            if not jnp.allclose(got, ref, **tol):
                err = float(jnp.max(jnp.abs(got - ref)))
                raise AssertionError(
                    f"mismatch vs reference ({name}, training={training}), "
                    f"max abs err={err}")
        assert y.shape == (N, Cout, H, W)

    print("KERNEL_OK")
</pallas_src>

<mosaic_0001>
module attributes {stable_mosaic.version = 11 : i64} {
  func.func @_spectral_sigma_kernel(%arg0: i32, %arg1: memref<128x36xf32, #tpu.memory_space<vmem>>, %arg2: memref<36x128xf32, #tpu.memory_space<vmem>>, %arg3: memref<1x128xf32, #tpu.memory_space<vmem>>, %arg4: memref<1x36xf32, #tpu.memory_space<vmem>>, %arg5: memref<1x128xf32, #tpu.memory_space<vmem>>, %arg6: memref<1x36xf32, #tpu.memory_space<vmem>>, %arg7: memref<1x1xf32, #tpu.memory_space<vmem>>) attributes {dimension_semantics = [#tpu.dimension_semantics<arbitrary>], iteration_bounds = array<i64: 1>, scalar_prefetch = 0 : i64, scratch_operands = 0 : i64, tpu.core_type = #tpu.core_type<tc>, window_params = [{pipeline_mode = #tpu.pipeline_mode<synchronous>, transform_indices = @transform_0, window_bounds = array<i64: 128, 36>}, {pipeline_mode = #tpu.pipeline_mode<synchronous>, transform_indices = @transform_1, window_bounds = array<i64: 36, 128>}, {pipeline_mode = #tpu.pipeline_mode<synchronous>, transform_indices = @transform_2, window_bounds = array<i64: 1, 128>}, {pipeline_mode = #tpu.pipeline_mode<synchronous>, transform_indices = @transform_3, window_bounds = array<i64: 1, 36>}, {pipeline_mode = #tpu.pipeline_mode<synchronous>, transform_indices = @transform_4, window_bounds = array<i64: 1, 128>}, {pipeline_mode = #tpu.pipeline_mode<synchronous>, transform_indices = @transform_5, window_bounds = array<i64: 1, 36>}, {pipeline_mode = #tpu.pipeline_mode<synchronous>, transform_indices = @transform_6, window_bounds = array<i64: 1, 1>}]} {
    %c0 = arith.constant 0 : index
    %c0_0 = arith.constant 0 : index
    %0 = vector.load %arg3[%c0, %c0_0] : memref<1x128xf32, #tpu.memory_space<vmem>>, vector<1x128xf32>
    %c0_1 = arith.constant 0 : index
    %c0_2 = arith.constant 0 : index
    %1 = vector.load %arg1[%c0_1, %c0_2] : memref<128x36xf32, #tpu.memory_space<vmem>>, vector<128x36xf32>
    %cst = arith.constant dense<0.000000e+00> : vector<1x36xf32>
    %2 = tpu.matmul %0, %1, %cst {dimension_numbers = #tpu.dot_dimension_numbers<[1], [0], [0], [1], [0, 0, 1, 1], [], []>} : vector<1x128xf32>, vector<128x36xf32>, vector<1x36xf32> -> vector<1x36xf32>
    %3 = arith.mulf %2, %2 : vector<1x36xf32>
    %4 = vector.shape_cast %3 : vector<1x36xf32> to vector<1x1x36xf32>
    %cst_3 = arith.constant dense<0.000000e+00> : vector<1xf32>
    %5 = vector.multi_reduction <add>, %4, %cst_3 [1, 2] : vector<1x1x36xf32> to vector<1xf32>
    %6 = vector.shape_cast %5 : vector<1xf32> to vector<1x1x1xf32>
    %7 = vector.extract %6[0, 0, 0] : f32 from vector<1x1x1xf32>
    %8 = math.sqrt %7 : f32
    %cst_4 = arith.constant 9.99999996E-13 : f32
    %9 = arith.addf %8, %cst_4 : f32
    %10 = vector.broadcast %9 : f32 to vector<1x36xf32>
    %11 = arith.divf %2, %10 : vector<1x36xf32>
    %c0_5 = arith.constant 0 : index
    %c0_6 = arith.constant 0 : index
    %12 = vector.load %arg2[%c0_5, %c0_6] : memref<36x128xf32, #tpu.memory_space<vmem>>, vector<36x128xf32>
    %cst_7 = arith.constant dense<0.000000e+00> : vector<1x128xf32>
    %13 = tpu.matmul %11, %12, %cst_7 {dimension_numbers = #tpu.dot_dimension_numbers<[1], [0], [0], [1], [0, 0, 1, 1], [], []>} : vector<1x36xf32>, vector<36x128xf32>, vector<1x128xf32> -> vector<1x128xf32>
    %14 = arith.mulf %13, %13 : vector<1x128xf32>
    %15 = vector.shape_cast %14 : vector<1x128xf32> to vector<1x1x128xf32>
    %cst_8 = arith.constant dense<0.000000e+00> : vector<1xf32>
    %16 = vector.multi_reduction <add>, %15, %cst_8 [1, 2] : vector<1x1x128xf32> to vector<1xf32>
    %17 = vector.shape_cast %16 : vector<1xf32> to vector<1x1x1xf32>
    %18 = vector.extract %17[0, 0, 0] : f32 from vector<1x1x1xf32>
    %19 = math.sqrt %18 : f32
    %cst_9 = arith.constant 9.99999996E-13 : f32
    %20 = arith.addf %19, %cst_9 : f32
    %21 = vector.broadcast %20 : f32 to vector<1x128xf32>
    %22 = arith.divf %13, %21 : vector<1x128xf32>
    %c0_10 = arith.constant 0 : index
    %c0_11 = arith.constant 0 : index
    %23 = vector.load %arg2[%c0_10, %c0_11] : memref<36x128xf32, #tpu.memory_space<vmem>>, vector<36x128xf32>
    %cst_12 = arith.constant dense<0.000000e+00> : vector<1x128xf32>
    %24 = tpu.matmul %11, %23, %cst_12 {dimension_numbers = #tpu.dot_dimension_numbers<[1], [0], [0], [1], [0, 0, 1, 1], [], []>} : vector<1x36xf32>, vector<36x128xf32>, vector<1x128xf32> -> vector<1x128xf32>
    %25 = arith.mulf %22, %24 : vector<1x128xf32>
    %26 = vector.shape_cast %25 : vector<1x128xf32> to vector<1x1x128xf32>
    %cst_13 = arith.constant dense<0.000000e+00> : vector<1xf32>
    %27 = vector.multi_reduction <add>, %26, %cst_13 [1, 2] : vector<1x1x128xf32> to vector<1xf32>
    %28 = vector.shape_cast %27 : vector<1xf32> to vector<1x1x1xf32>
    %29 = vector.extract %28[0, 0, 0] : f32 from vector<1x1x1xf32>
    %c0_14 = arith.constant 0 : index
    %c0_15 = arith.constant 0 : index
    %30 = vector.load %arg5[%c0_14, %c0_15] : memref<1x128xf32, #tpu.memory_space<vmem>>, vector<1x128xf32>
    tpu.vector_store %arg5[%c0_14, %c0_15], %22 {strides = array<i32>} : memref<1x128xf32, #tpu.memory_space<vmem>>, vector<1x128xf32>,
    %c0_16 = arith.constant 0 : index
    %c0_17 = arith.constant 0 : index
    %31 = vector.load %arg6[%c0_16, %c0_17] : memref<1x36xf32, #tpu.memory_space<vmem>>, vector<1x36xf32>
    tpu.vector_store %arg6[%c0_16, %c0_17], %11 {strides = array<i32>} : memref<1x36xf32, #tpu.memory_space<vmem>>, vector<1x36xf32>,
    %cst_18 = arith.constant 1.000000e+00 : f32
    %32 = arith.divf %cst_18, %29 : f32
    %33 = vector.broadcast %32 : f32 to vector<1x1xf32>
    %c0_19 = arith.constant 0 : index
    %c0_20 = arith.constant 0 : index
    %34 = vector.load %arg7[%c0_19, %c0_20] : memref<1x1xf32, #tpu.memory_space<vmem>>, vector<1x1xf32>
    tpu.vector_store %arg7[%c0_19, %c0_20], %33 {strides = array<i32>} : memref<1x1xf32, #tpu.memory_space<vmem>>, vector<1x1xf32>,
    return
  }
  func.func @transform_0(%arg0: i32) -> (i32, i32) {
    %c0_i32 = arith.constant 0 : i32
    %c0_i32_0 = arith.constant 0 : i32
    %c0_i32_1 = arith.constant 0 : i32
    return %c0_i32, %c0_i32_0 : i32, i32
  }
  func.func @transform_1(%arg0: i32) -> (i32, i32) {
    %c0_i32 = arith.constant 0 : i32
    %c0_i32_0 = arith.constant 0 : i32
    %c0_i32_1 = arith.constant 0 : i32
    return %c0_i32, %c0_i32_0 : i32, i32
  }
  func.func @transform_2(%arg0: i32) -> (i32, i32) {
    %c0_i32 = arith.constant 0 : i32
    %c0_i32_0 = arith.constant 0 : i32
    %c0_i32_1 = arith.constant 0 : i32
    return %c0_i32, %c0_i32_0 : i32, i32
  }
  func.func @transform_3(%arg0: i32) -> (i32, i32) {
    %c0_i32 = arith.constant 0 : i32
    %c0_i32_0 = arith.constant 0 : i32
    %c0_i32_1 = arith.constant 0 : i32
    return %c0_i32, %c0_i32_0 : i32, i32
  }
  func.func @transform_4(%arg0: i32) -> (i32, i32) {
    %c0_i32 = arith.constant 0 : i32
    %c0_i32_0 = arith.constant 0 : i32
    %c0_i32_1 = arith.constant 0 : i32
    return %c0_i32, %c0_i32_0 : i32, i32
  }
  func.func @transform_5(%arg0: i32) -> (i32, i32) {
    %c0_i32 = arith.constant 0 : i32
    %c0_i32_0 = arith.constant 0 : i32
    %c0_i32_1 = arith.constant 0 : i32
    return %c0_i32, %c0_i32_0 : i32, i32
  }
  func.func @transform_6(%arg0: i32) -> (i32, i32) {
    %c0_i32 = arith.constant 0 : i32
    %c0_i32_0 = arith.constant 0 : i32
    %c0_i32_1 = arith.constant 0 : i32
    return %c0_i32, %c0_i32_0 : i32, i32
  }
}

module attributes {stable_mosaic.version = 11 : i64} {
  func.func @_sn_conv_kernel(%arg0: i32, %arg1: memref<1x18x18x4xf32, #tpu.memory_space<vmem>>, %arg2: memref<36x128xf32, #tpu.memory_space<vmem>>, %arg3: memref<1x1xf32, #tpu.memory_space<vmem>>, %arg4: memref<1x128xf32, #tpu.memory_space<vmem>>, %arg5: memref<1x256x128xf32, #tpu.memory_space<vmem>>, %arg6: memref<16x16x36xf32, #tpu.memory_space<vmem>>) attributes {dimension_semantics = [#tpu.dimension_semantics<parallel>], iteration_bounds = array<i64: 2>, scalar_prefetch = 0 : i64, scratch_operands = 1 : i64, tpu.core_type = #tpu.core_type<tc>, window_params = [{transform_indices = @transform_0, window_bounds = array<i64: 1, 18, 18, 4>}, {pipeline_mode = #tpu.pipeline_mode<synchronous>, transform_indices = @transform_1, window_bounds = array<i64: 36, 128>}, {pipeline_mode = #tpu.pipeline_mode<synchronous>, transform_indices = @transform_2, window_bounds = array<i64: 1, 1>}, {pipeline_mode = #tpu.pipeline_mode<synchronous>, transform_indices = @transform_3, window_bounds = array<i64: 1, 128>}, {transform_indices = @transform_4, window_bounds = array<i64: 1, 256, 128>}]} {
    %c0 = arith.constant 0 : index
    %c0_0 = arith.constant 0 : index
    %c0_1 = arith.constant 0 : index
    %c0_2 = arith.constant 0 : index
    %0 = vector.load %arg1[%c0, %c0_0, %c0_1, %c0_2] : memref<1x18x18x4xf32, #tpu.memory_space<vmem>>, vector<1x16x16x4xf32>
    %1 = vector.shape_cast %0 : vector<1x16x16x4xf32> to vector<16x16x4xf32>
    %c0_3 = arith.constant 0 : index
    %c0_4 = arith.constant 0 : index
    %c0_5 = arith.constant 0 : index
    %2 = vector.load %arg6[%c0_3, %c0_4, %c0_5] : memref<16x16x36xf32, #tpu.memory_space<vmem>>, vector<16x16x4xf32>
    tpu.vector_store %arg6[%c0_3, %c0_4, %c0_5], %1 {strides = array<i32>} : memref<16x16x36xf32, #tpu.memory_space<vmem>>, vector<16x16x4xf32>,
    %c0_6 = arith.constant 0 : index
    %c0_7 = arith.constant 0 : index
    %c1 = arith.constant 1 : index
    %c0_8 = arith.constant 0 : index
    %3 = vector.load %arg1[%c0_6, %c0_7, %c1, %c0_8] : memref<1x18x18x4xf32, #tpu.memory_space<vmem>>, vector<1x16x16x4xf32>
    %4 = vector.shape_cast %3 : vector<1x16x16x4xf32> to vector<16x16x4xf32>
    %c0_9 = arith.constant 0 : index
    %c0_10 = arith.constant 0 : index
    %c4 = arith.constant 4 : index
    %5 = vector.load %arg6[%c0_9, %c0_10, %c4] : memref<16x16x36xf32, #tpu.memory_space<vmem>>, vector<16x16x4xf32>
    tpu.vector_store %arg6[%c0_9, %c0_10, %c4], %4 {strides = array<i32>} : memref<16x16x36xf32, #tpu.memory_space<vmem>>, vector<16x16x4xf32>,
    %c0_11 = arith.constant 0 : index
    %c0_12 = arith.constant 0 : index
    %c2 = arith.constant 2 : index
    %c0_13 = arith.constant 0 : index
    %6 = vector.load %arg1[%c0_11, %c0_12, %c2, %c0_13] : memref<1x18x18x4xf32, #tpu.memory_space<vmem>>, vector<1x16x16x4xf32>
    %7 = vector.shape_cast %6 : vector<1x16x16x4xf32> to vector<16x16x4xf32>
    %c0_14 = arith.constant 0 : index
    %c0_15 = arith.constant 0 : index
    %c8 = arith.constant 8 : index
    %8 = vector.load %arg6[%c0_14, %c0_15, %c8] : memref<16x16x36xf32, #tpu.memory_space<vmem>>, vector<16x16x4xf32>
    tpu.vector_store %arg6[%c0_14, %c0_15, %c8], %7 {strides = array<i32>} : memref<16x16x36xf32, #tpu.memory_space<vmem>>, vector<16x16x4xf32>,
    %c0_16 = arith.constant 0 : index
    %c1_17 = arith.constant 1 : index
    %c0_18 = arith.constant 0 : index
    %c0_19 = arith.constant 0 : index
    %9 = vector.load %arg1[%c0_16, %c1_17, %c0_18, %c0_19] : memref<1x18x18x4xf32, #tpu.memory_space<vmem>>, vector<1x16x16x4xf32>
    %10 = vector.shape_cast %9 : vector<1x16x16x4xf32> to vector<16x16x4xf32>
    %c0_20 = arith.constant 0 : index
    %c0_21 = arith.constant 0 : index
    %c12 = arith.constant 12 : index
    %11 = vector.load %arg6[%c0_20, %c0_21, %c12] : memref<16x16x36xf32, #tpu.memory_space<vmem>>, vector<16x16x4xf32>
    tpu.vector_store %arg6[%c0_20, %c0_21, %c12], %10 {strides = array<i32>} : memref<16x16x36xf32, #tpu.memory_space<vmem>>, vector<16x16x4xf32>,
    %c0_22 = arith.constant 0 : index
    %c1_23 = arith.constant 1 : index
    %c1_24 = arith.constant 1 : index
    %c0_25 = arith.constant 0 : index
    %12 = vector.load %arg1[%c0_22, %c1_23, %c1_24, %c0_25] : memref<1x18x18x4xf32, #tpu.memory_space<vmem>>, vector<1x16x16x4xf32>
    %13 = vector.shape_cast %12 : vector<1x16x16x4xf32> to vector<16x16x4xf32>
    %c0_26 = arith.constant 0 : index
    %c0_27 = arith.constant 0 : index
    %c16 = arith.constant 16 : index
    %14 = vector.load %arg6[%c0_26, %c0_27, %c16] : memref<16x16x36xf32, #tpu.memory_space<vmem>>, vector<16x16x4xf32>
    tpu.vector_store %arg6[%c0_26, %c0_27, %c16], %13 {strides = array<i32>} : memref<16x16x36xf32, #tpu.memory_space<vmem>>, vector<16x16x4xf32>,
    %c0_28 = arith.constant 0 : index
    %c1_29 = arith.constant 1 : index
    %c2_30 = arith.constant 2 : index
    %c0_31 = arith.constant 0 : index
    %15 = vector.load %arg1[%c0_28, %c1_29, %c2_30, %c0_31] : memref<1x18x18x4xf32, #tpu.memory_space<vmem>>, vector<1x16x16x4xf32>
    %16 = vector.shape_cast %15 : vector<1x16x16x4xf32> to vector<16x16x4xf32>
    %c0_32 = arith.constant 0 : index
    %c0_33 = arith.constant 0 : index
    %c20 = arith.constant 20 : index
    %17 = vector.load %arg6[%c0_32, %c0_33, %c20] : memref<16x16x36xf32, #tpu.memory_space<vmem>>, vector<16x16x4xf32>
    tpu.vector_store %arg6[%c0_32, %c0_33, %c20], %16 {strides = array<i32>} : memref<16x16x36xf32, #tpu.memory_space<vmem>>, vector<16x16x4xf32>,
    %c0_34 = arith.constant 0 : index
    %c2_35 = arith.constant 2 : index
    %c0_36 = arith.constant 0 : index
    %c0_37 = arith.constant 0 : index
    %18 = vector.load %arg1[%c0_34, %c2_35, %c0_36, %c0_37] : memref<1x18x18x4xf32, #tpu.memory_space<vmem>>, vector<1x16x16x4xf32>
    %19 = vector.shape_cast %18 : vector<1x16x16x4xf32> to vector<16x16x4xf32>
    %c0_38 = arith.constant 0 : index
    %c0_39 = arith.constant 0 : index
    %c24 = arith.constant 24 : index
    %20 = vector.load %arg6[%c0_38, %c0_39, %c24] : memref<16x16x36xf32, #tpu.memory_space<vmem>>, vector<16x16x4xf32>
    tpu.vector_store %arg6[%c0_38, %c0_39, %c24], %19 {strides = array<i32>} : memref<16x16x36xf32, #tpu.memory_space<vmem>>, vector<16x16x4xf32>,
    %c0_40 = arith.constant 0 : index
    %c2_41 = arith.constant 2 : index
    %c1_42 = arith.constant 1 : index
    %c0_43 = arith.constant 0 : index
    %21 = vector.load %arg1[%c0_40, %c2_41, %c1_42, %c0_43] : memref<1x18x18x4xf32, #tpu.memory_space<vmem>>, vector<1x16x16x4xf32>
    %22 = vector.shape_cast %21 : vector<1x16x16x4xf32> to vector<16x16x4xf32>
    %c0_44 = arith.constant 0 : index
    %c0_45 = arith.constant 0 : index
    %c28 = arith.constant 28 : index
    %23 = vector.load %arg6[%c0_44, %c0_45, %c28] : memref<16x16x36xf32, #tpu.memory_space<vmem>>, vector<16x16x4xf32>
    tpu.vector_store %arg6[%c0_44, %c0_45, %c28], %22 {strides = array<i32>} : memref<16x16x36xf32, #tpu.memory_space<vmem>>, vector<16x16x4xf32>,
    %c0_46 = arith.constant 0 : index
    %c2_47 = arith.constant 2 : index
    %c2_48 = arith.constant 2 : index
    %c0_49 = arith.constant 0 : index
    %24 = vector.load %arg1[%c0_46, %c2_47, %c2_48, %c0_49] : memref<1x18x18x4xf32, #tpu.memory_space<vmem>>, vector<1x16x16x4xf32>
    %25 = vector.shape_cast %24 : vector<1x16x16x4xf32> to vector<16x16x4xf32>
    %c0_50 = arith.constant 0 : index
    %c0_51 = arith.constant 0 : index
    %c32 = arith.constant 32 : index
    %26 = vector.load %arg6[%c0_50, %c0_51, %c32] : memref<16x16x36xf32, #tpu.memory_space<vmem>>, vector<16x16x4xf32>
    tpu.vector_store %arg6[%c0_50, %c0_51, %c32], %25 {strides = array<i32>} : memref<16x16x36xf32, #tpu.memory_space<vmem>>, vector<16x16x4xf32>,
    %c0_52 = arith.constant 0 : index
    %c0_53 = arith.constant 0 : index
    %c0_54 = arith.constant 0 : index
    %27 = vector.load %arg6[%c0_52, %c0_53, %c0_54] : memref<16x16x36xf32, #tpu.memory_space<vmem>>, vector<16x16x36xf32>
    %28 = vector.shape_cast %27 : vector<16x16x36xf32> to vector<256x36xf32>
    %c0_55 = arith.constant 0 : index
    %c0_56 = arith.constant 0 : index
    %29 = vector.load %arg2[%c0_55, %c0_56] : memref<36x128xf32, #tpu.memory_space<vmem>>, vector<36x128xf32>
    %cst = arith.constant dense<0.000000e+00> : vector<256x128xf32>
    %30 = tpu.matmul %28, %29, %cst {dimension_numbers = #tpu.dot_dimension_numbers<[1], [0], [0], [1], [0, 0, 1, 1], [], []>} : vector<256x36xf32>, vector<36x128xf32>, vector<256x128xf32> -> vector<256x128xf32>
    %c0_57 = arith.constant 0 : index
    %c0_58 = arith.constant 0 : index
    %31 = vector.load %arg3[%c0_57, %c0_58] : memref<1x1xf32, #tpu.memory_space<vmem>>, vector<1x1xf32>
    %32 = vector.extract %31[0, 0] : f32 from vector<1x1xf32>
    %33 = vector.broadcast %32 : f32 to vector<256x128xf32>
    %34 = arith.mulf %30, %33 : vector<256x128xf32>
    %c0_59 = arith.constant 0 : index
    %c0_60 = arith.constant 0 : index
    %35 = vector.load %arg4[%c0_59, %c0_60] : memref<1x128xf32, #tpu.memory_space<vmem>>, vector<1x128xf32>
    %36 = vector.shape_cast %35 : vector<1x128xf32> to vector<128xf32>
    %37 = vector.shape_cast %36 : vector<128xf32> to vector<1x128xf32>
    %38 = vector.broadcast %37 : vector<1x128xf32> to vector<256x128xf32>
    %39 = arith.addf %34, %38 : vector<256x128xf32>
    %40 = vector.shape_cast %39 : vector<256x128xf32> to vector<1x256x128xf32>
    %c0_61 = arith.constant 0 : index
    %c0_62 = arith.constant 0 : index
    %c0_63 = arith.constant 0 : index
    %41 = vector.load %arg5[%c0_61, %c0_62, %c0_63] : memref<1x256x128xf32, #tpu.memory_space<vmem>>, vector<1x256x128xf32>
    tpu.vector_store %arg5[%c0_61, %c0_62, %c0_63], %40 {strides = array<i32>} : memref<1x256x128xf32, #tpu.memory_space<vmem>>, vector<1x256x128xf32>,
    return
  }
  func.func @transform_0(%arg0: i32) -> (i32, i32, i32, i32) {
    %c0_i32 = arith.constant 0 : i32
    %c0_i32_0 = arith.constant 0 : i32
    %c0_i32_1 = arith.constant 0 : i32
    %c0_i32_2 = arith.constant 0 : i32
    return %arg0, %c0_i32, %c0_i32_0, %c0_i32_1 : i32, i32, i32, i32
  }
  func.func @transform_1(%arg0: i32) -> (i32, i32) {
    %c0_i32 = arith.constant 0 : i32
    %c0_i32_0 = arith.constant 0 : i32
    %c0_i32_1 = arith.constant 0 : i32
    return %c0_i32, %c0_i32_0 : i32, i32
  }
  func.func @transform_2(%arg0: i32) -> (i32, i32) {
    %c0_i32 = arith.constant 0 : i32
    %c0_i32_0 = arith.constant 0 : i32
    %c0_i32_1 = arith.constant 0 : i32
    return %c0_i32, %c0_i32_0 : i32, i32
  }
  func.func @transform_3(%arg0: i32) -> (i32, i32) {
    %c0_i32 = arith.constant 0 : i32
    %c0_i32_0 = arith.constant 0 : i32
    %c0_i32_1 = arith.constant 0 : i32
    return %c0_i32, %c0_i32_0 : i32, i32
  }
  func.func @transform_4(%arg0: i32) -> (i32, i32, i32) {
    %c0_i32 = arith.constant 0 : i32
    %c0_i32_0 = arith.constant 0 : i32
    %c0_i32_1 = arith.constant 0 : i32
    return %arg0, %c0_i32, %c0_i32_0 : i32, i32, i32
  }
}

</mosaic_0001>

<llo_original>
// kernel: spectral_norm_conv2d_forward.2
$region0: #{spectral_norm_conv2d_forward.2}
  #allocation0 [shape = 'u32[]', space=smem, size = 0x4, offset = 0x4, fixed_abs, tag = 'smem constant byte address 0x4 - core index']
  #allocation1 [shape = 'u32[144,128]{1,0:T(1,128)}', space=vmem, size = 0x12000, scoped, tag = 'internal scratch']
  %s0 = inlined_call_operand.vmem [shape: f32[128,36], index: 0, kind: input, shape index: {}]
  %s1 = inlined_call_operand.vmem [shape: f32[36,128], index: 1, kind: input, shape index: {}]
  %s2 = inlined_call_operand.vmem [shape: f32[1,128], index: 2, kind: input, shape index: {}]
  %s3 = inlined_call_operand.vmem [shape: f32[1,36], index: 3, kind: input, shape index: {}]
  %s4 = inlined_call_operand.hbm [shape: f32[1,128], index: 4, kind: output, shape index: {0}]
  %s5 = inlined_call_operand.hbm [shape: f32[1,36], index: 5, kind: output, shape index: {1}]
  %s6 = inlined_call_operand.hbm [shape: f32[1,1], index: 6, kind: output, shape index: {2}]
  %7 = xla_tuple %s4, %s5, %s6
  %s8 = sld [smem:[#allocation0]]
  $region42: #{spectral_norm_conv2d_forward.2} parent=0
    _
  %s10 = ssub.s32 1, %s8
  %s11 = scalar_select 0, %s10, %s8
  $region1: #{spectral_norm_conv2d_forward.2} parent=0
    #allocation2 [shape = 'u8[512]{0}', space=vmem, size = 0x400, scoped, tag = 'output window, operand 0, single buffered']
    #allocation3 [shape = 's32[1]{0}', space=sflag, size = 0x4, scoped, tag = 'scoped memory for spectral_norm_conv2d_forward.2']
    #allocation4 [shape = 'u8[512]{0}', space=vmem, size = 0x400, scoped, tag = 'output window, operand 1, single buffered']
    #allocation5 [shape = 's32[1]{0}', space=sflag, size = 0x4, scoped, tag = 'scoped memory for spectral_norm_conv2d_forward.2']
    #allocation6 [shape = 'u8[512]{0}', space=vmem, size = 0x400, scoped, tag = 'output window, operand 2, single buffered']
    %12 = vsyncpa [#allocation3], 0
    %13 = vsyncpa [#allocation5], 0
    // Predicated region
    $region2: #{spectral_norm_conv2d_forward.2} parent=1 // pred_check
      _
    $region3: #{spectral_norm_conv2d_forward.2} parent=1 // pred_check_branch
      %15 = sbr.rel (0) target = $region5
    $region4: #{spectral_norm_conv2d_forward.2} parent=1 // pred_region
      _
    $region5: #{spectral_norm_conv2d_forward.2} parent=1 // pred_fallthru
      _
    // Predicated region
    $region6: #{spectral_norm_conv2d_forward.2} parent=1 // pred_check
      _
    $region7: #{spectral_norm_conv2d_forward.2} parent=1 // pred_check_branch
      %17 = sbr.rel (0) target = $region9
    $region8: #{spectral_norm_conv2d_forward.2} parent=1 // pred_region
      _
    $region9: #{spectral_norm_conv2d_forward.2} parent=1 // pred_fallthru
      _
    // Predicated region
    $region10: #{spectral_norm_conv2d_forward.2} parent=1 // pred_check
      _
    $region11: #{spectral_norm_conv2d_forward.2} parent=1 // pred_check_branch
      %19 = sbr.rel (0) target = $region13
    $region12: #{spectral_norm_conv2d_forward.2} parent=1 // pred_region
      _
    $region13: #{spectral_norm_conv2d_forward.2} parent=1 // pred_fallthru
      _
    // Predicated region
    $region14: #{spectral_norm_conv2d_forward.2} parent=1 // pred_check
      _
    $region15: #{spectral_norm_conv2d_forward.2} parent=1 // pred_check_branch
      %21 = sbr.rel (0) target = $region17
    $region16: #{spectral_norm_conv2d_forward.2} parent=1 // pred_region
      _
    $region17: #{spectral_norm_conv2d_forward.2} parent=1 // pred_fallthru
      _
    %v22 = vld [vmem:[%s2] sm:$0x1]
    %v23 = vld [vmem:[%s0] sm:$0xff]
    %v24 = vld [vmem:[%s0 + $0x8] sm:$0xff]
    %v25 = vld [vmem:[%s0 + $0x10] sm:$0xff]
    %v26 = vld [vmem:[%s0 + $0x18] sm:$0xff]
    %v27 = vld [vmem:[%s0 + $0x20] sm:$0xff]
    %v28 = vld [vmem:[%s0 + $0x28] sm:$0xff]
    %v29 = vld [vmem:[%s0 + $0x30] sm:$0xff]
    %v30 = vld [vmem:[%s0 + $0x38] sm:$0xff]
    %v31 = vld [vmem:[%s0 + $0x40] sm:$0xff]
    %v32 = vld [vmem:[%s0 + $0x48] sm:$0xff]
    %v33 = vld [vmem:[%s0 + $0x50] sm:$0xff]
    %v34 = vld [vmem:[%s0 + $0x58] sm:$0xff]
    %v35 = vld [vmem:[%s0 + $0x60] sm:$0xff]
    %v36 = vld [vmem:[%s0 + $0x68] sm:$0xff]
    %v37 = vld [vmem:[%s0 + $0x70] sm:$0xff]
    %v38 = vld [vmem:[%s0 + $0x78] sm:$0xff]
    %39 = vmatprep.subr.mxu0 0.0
    %40 = vmatpush1.msra.mxu0 %v23
    %41 = vmatprep.subr.mxu0 0.0
    %42 = vmatpush1.msra.mxu0 %v24
    %43 = vmatprep.subr.mxu0 0.0
    %44 = vmatpush1.msra.mxu0 %v25
    %45 = vmatprep.subr.mxu0 0.0
    %46 = vmatpush1.msra.mxu0 %v26
    %47 = vmatprep.subr.mxu0 0.0
    %48 = vmatpush1.msra.mxu0 %v27
    %49 = vmatprep.subr.mxu0 0.0
    %50 = vmatpush1.msra.mxu0 %v28
    %51 = vmatprep.subr.mxu0 0.0
    %52 = vmatpush1.msra.mxu0 %v29
    %53 = vmatprep.subr.mxu0 0.0
    %54 = vmatpush1.msra.mxu0 %v30
    %55 = vmatprep.subr.mxu0 0.0
    %56 = vmatpush1.msra.mxu0 %v31
    %57 = vmatprep.subr.mxu0 0.0
    %58 = vmatpush1.msra.mxu0 %v32
    %59 = vmatprep.subr.mxu0 0.0
    %60 = vmatpush1.msra.mxu0 %v33
    %61 = vmatprep.subr.mxu0 0.0
    %62 = vmatpush1.msra.mxu0 %v34
    %63 = vmatprep.subr.mxu0 0.0
    %64 = vmatpush1.msra.mxu0 %v35
    %65 = vmatprep.subr.mxu0 0.0
    %66 = vmatpush1.msra.mxu0 %v36
    %67 = vmatprep.subr.mxu0 0.0
    %68 = vmatpush1.msra.mxu0 %v37
    %69 = vmatprep.subr.mxu0 0.0
    %70 = vmatpush1.msra.mxu0 %v38
    %71 = vmatprep.subr.mxu0 0.0
    %72 = vmatpush1.msra.mxu0 0.0
    %73 = vmatprep.subr.mxu0 0.0
    %74 = vmatpush1.msra.mxu0 0.0
    %75 = vmatprep.subr.mxu0 0.0
    %76 = vmatpush1.msra.mxu0 0.0
    %77 = vmatprep.subr.mxu0 0.0
    %78 = vmatpush1.msra.mxu0 0.0
    %79 = vmatprep.subr.mxu0 0.0
    %80 = vmatpush1.msra.mxu0 0.0
    %81 = vmatprep.subr.mxu0 0.0
    %82 = vmatpush1.msra.mxu0 0.0
    %83 = vmatprep.subr.mxu0 0.0
    %84 = vmatpush1.msra.mxu0 0.0
    %85 = vmatprep.subr.mxu0 0.0
    %86 = vmatpush1.msra.mxu0 0.0
    %87 = vmatprep.subr.mxu0 0.0
    %88 = vmatpush1.msra.mxu0 0.0
    %89 = vmatprep.subr.mxu0 0.0
    %90 = vmatpush1.msra.mxu0 0.0
    %91 = vmatprep.subr.mxu0 0.0
    %92 = vmatpush1.msra.mxu0 0.0
    %93 = vmatprep.subr.mxu0 0.0
    %94 = vmatpush1.msra.mxu0 0.0
    %95 = vmatprep.subr.mxu0 0.0
    %96 = vmatpush1.msra.mxu0 0.0
    %97 = vmatprep.subr.mxu0 0.0
    %98 = vmatpush1.msra.mxu0 0.0
    %99 = vmatprep.subr.mxu0 0.0
    %100 = vmatpush1.msra.mxu0 0.0
    %101 = vmatprep.subr.mxu0 0.0
    %102 = vmatpush1.msra.mxu0 0.0
    %103 = vmatprep.mubr.f32.mxu0 0.0
    %104 = vmatmul.mubr.f32.gmra.mrb[0].mxu0 %v22
    %v105 = vpop.f32.mrb[0].mxu0
    %v106 = vadd.f32 0.0, %v105
    %v107 = vpop.f32.mrb[0].mxu0
    %108 = vdwg.mxu0
    %v109 = vmul.f32 %v106, %v106
    %vm110 = vcmask 286720
    %v111 = vsel %vm110, %v109, 0.0
    %112 = vadd.xlane.f32.xlu0 %v111
    %v113 = vpop.xlane.xlu0 %112
    %v114 = vrot.slane %v113, 4
    %v115 = vadd.f32 %v113, %v114
    %v116 = vrot.slane %v115, 2
    %v117 = vadd.f32 %v115, %v116
    %v118 = vrot.slane %v117, 1
    %v119 = vadd.f32 %v117, %v118
    %s120 = vtos %v119
    %v121 = vstv %s120
    %v122 = vrsqrt.pop %v121
    %v123 = vmul.f32 %v121, %v122
    %vm124 = vcmp.eq.f32.partialorder %v121, inf
    %v125 = vsel %vm124, %v121, %v123
    %vm126 = vcmp.eq.f32.partialorder %v121, 0.0
    %v127 = vand.u32 %v121, 2147483648
    %v128 = vsel %vm126, %v127, %v125
    %s129 = vtos %v128
    %s130 = sadd.f32 %s129, 1e-12
    %v131 = vstv %s130
    %v132 = vrcp.pop %v131
    %v133 = vmul.f32 %v106, %v132
    %v134 = vld [vmem:[%s1] sm:$0xff]
    %v135 = vld [vmem:[%s1 + $0x8] sm:$0xff]
    %v136 = vld [vmem:[%s1 + $0x10] sm:$0xff]
    %v137 = vld [vmem:[%s1 + $0x18] sm:$0xff]
    %v138 = vld [vmem:[%s1 + $0x20] sm:$0xf]
    %vm139 = vcmask 293888
    %v141 = vsel %vm139, %v133, 0
    %vm143 = vcmask 1043456
    %v145 = vsel %vm143, %v138, 0
    %147 = vmatprep.subr.mxu0 0.0
    %148 = vmatpush1.msra.mxu0 %v134
    %149 = vmatprep.subr.mxu0 0.0
    %150 = vmatpush1.msra.mxu0 %v135
    %151 = vmatprep.subr.mxu0 0.0
    %152 = vmatpush1.msra.mxu0 %v136
    %153 = vmatprep.subr.mxu0 0.0
    %154 = vmatpush1.msra.mxu0 %v137
    %155 = vmatprep.subr.mxu0 0.0
    %156 = vmatpush1.msra.mxu0 %v145
    %157 = vmatprep.subr.mxu0 0.0
    %158 = vmatpush1.msra.mxu0 0.0
    %159 = vmatprep.subr.mxu0 0.0
    %160 = vmatpush1.msra.mxu0 0.0
    %161 = vmatprep.subr.mxu0 0.0
    %162 = vmatpush1.msra.mxu0 0.0
    %163 = vmatprep.subr.mxu0 0.0
    %164 = vmatpush1.msra.mxu0 0.0
    %165 = vmatprep.subr.mxu0 0.0
    %166 = vmatpush1.msra.mxu0 0.0
    %167 = vmatprep.subr.mxu0 0.0
    %168 = vmatpush1.msra.mxu0 0.0
    %169 = vmatprep.subr.mxu0 0.0
    %170 = vmatpush1.msra.mxu0 0.0
    %171 = vmatprep.subr.mxu0 0.0
    %172 = vmatpush1.msra.mxu0 0.0
    %173 = vmatprep.subr.mxu0 0.0
    %174 = vmatpush1.msra.mxu0 0.0
    %175 = vmatprep.subr.mxu0 0.0
    %176 = vmatpush1.msra.mxu0 0.0
    %177 = vmatprep.subr.mxu0 0.0
    %178 = vmatpush1.msra.mxu0 0.0
    %179 = vmatprep.subr.mxu0 0.0
    %180 = vmatpush1.msra.mxu0 0.0
    %181 = vmatprep.subr.mxu0 0.0
    %182 = vmatpush1.msra.mxu0 0.0
    %183 = vmatprep.subr.mxu0 0.0
    %184 = vmatpush1.msra.mxu0 0.0
    %185 = vmatprep.subr.mxu0 0.0
    %186 = vmatpush1.msra.mxu0 0.0
    %187 = vmatprep.subr.mxu0 0.0
    %188 = vmatpush1.msra.mxu0 0.0
    %189 = vmatprep.subr.mxu0 0.0
    %190 = vmatpush1.msra.mxu0 0.0
    %191 = vmatprep.subr.mxu0 0.0
    %192 = vmatpush1.msra.mxu0 0.0
    %193 = vmatprep.subr.mxu0 0.0
    %194 = vmatpush1.msra.mxu0 0.0
    %195 = vmatprep.subr.mxu0 0.0
    %196 = vmatpush1.msra.mxu0 0.0
    %197 = vmatprep.subr.mxu0 0.0
    %198 = vmatpush1.msra.mxu0 0.0
    %199 = vmatprep.subr.mxu0 0.0
    %200 = vmatpush1.msra.mxu0 0.0
    %201 = vmatprep.subr.mxu0 0.0
    %202 = vmatpush1.msra.mxu0 0.0
    %203 = vmatprep.subr.mxu0 0.0
    %204 = vmatpush1.msra.mxu0 0.0
    %205 = vmatprep.subr.mxu0 0.0
    %206 = vmatpush1.msra.mxu0 0.0
    %207 = vmatprep.subr.mxu0 0.0
    %208 = vmatpush1.msra.mxu0 0.0
    %209 = vmatprep.subr.mxu0 0.0
    %210 = vmatpush1.msra.mxu0 0.0
    %211 = vmatprep.mubr.f32.mxu0 0.0
    %212 = vmatmul.mubr.f32.gmra.mrb[0].mxu0 %v141
    %v213 = vpop.f32.mrb[0].mxu0
    %v214 = vadd.f32 0.0, %v213
    %v215 = vpop.f32.mrb[0].mxu0
    %216 = vdwg.mxu0
    %v217 = vmul.f32 %v214, %v214
    %vm218 = vcmask 1040384
    %v219 = vsel %vm218, %v217, 0.0
    %220 = vadd.xlane.f32.xlu0 %v219
    %v221 = vpop.xlane.xlu0 %220
    %v222 = vrot.slane %v221, 4
    %v223 = vadd.f32 %v221, %v222
    %v224 = vrot.slane %v223, 2
    %v225 = vadd.f32 %v223, %v224
    %v226 = vrot.slane %v225, 1
    %v227 = vadd.f32 %v225, %v226
    %s228 = vtos %v227
    %v229 = vstv %s228
    %v230 = vrsqrt.pop %v229
    %v231 = vmul.f32 %v229, %v230
    %vm232 = vcmp.eq.f32.partialorder %v229, inf
    %v233 = vsel %vm232, %v229, %v231
    %vm234 = vcmp.eq.f32.partialorder %v229, 0.0
    %v235 = vand.u32 %v229, 2147483648
    %v236 = vsel %vm234, %v235, %v233
    %s237 = vtos %v236
    %s238 = sadd.f32 %s237, 1e-12
    %v239 = vstv %s238
    %v240 = vrcp.pop %v239
    %v241 = vmul.f32 %v214, %v240
    %v242 = vmul.f32 %v241, %v214
    %v243 = vsel %vm218, %v242, 0.0
    %244 = vadd.xlane.f32.xlu0 %v243
    %v245 = vpop.xlane.xlu0 %244
    %v246 = vrot.slane %v245, 4
    %v247 = vadd.f32 %v245, %v246
    %v248 = vrot.slane %v247, 2
    %v249 = vadd.f32 %v247, %v248
    %v250 = vrot.slane %v249, 1
    %v251 = vadd.f32 %v249, %v250
    %s252 = vtos %v251
    %253 = vst [vmem:[#allocation2] sm:$0x1] %v241
    %254 = vst.msk [vmem:[#allocation4] sm:$0x1] %vm110, %v133
    %v255 = vstv %s252
    %v256 = vrcp.pop %v255
    %s257 = vtos %v256
    %v258 = vstv %s257
    %vm259 = vcmask 0
    %260 = vst.msk [vmem:[#allocation6] sm:$0x1] %vm259, %v258
    // Predicated region
    $region18: #{spectral_norm_conv2d_forward.2} parent=1 // pred_check
      _
    $region19: #{spectral_norm_conv2d_forward.2} parent=1 // pred_check_branch
      %262 = sbr.rel (0) target = $region21
    $region20: #{spectral_norm_conv2d_forward.2} parent=1 // pred_region
      %s264 = ssub.s32 16, 16
      %265 = vsyncadd [#allocation3], %s264
      %s267 = sshll.u32 [#allocation2], 4
      %s268 = int_to_ptr.vmem [resolvable:$true] %s267
      %270 = dma.vmem_to_hbm [thread:$0]  %s268, 16, %s4, [#allocation3]
    $region21: #{spectral_norm_conv2d_forward.2} parent=1 // pred_fallthru
      _
    // Predicated region
    $region22: #{spectral_norm_conv2d_forward.2} parent=1 // pred_check
      _
    $region23: #{spectral_norm_conv2d_forward.2} parent=1 // pred_check_branch
      %272 = sbr.rel (0) target = $region25
    $region24: #{spectral_norm_conv2d_forward.2} parent=1 // pred_region
      %s274 = ssub.s32 16, 16
      %275 = vsyncadd [#allocation5], %s274
      %s277 = sshll.u32 [#allocation4], 4
      %s278 = int_to_ptr.vmem [resolvable:$true] %s277
      %280 = dma.vmem_to_hbm [thread:$0]  %s278, 16, %s5, [#allocation5]
    $region25: #{spectral_norm_conv2d_forward.2} parent=1 // pred_fallthru
      _
    // Predicated region
    $region26: #{spectral_norm_conv2d_forward.2} parent=1 // pred_check
      _
    $region27: #{spectral_norm_conv2d_forward.2} parent=1 // pred_check_branch
      %282 = sbr.rel (0) target = $region29
    $region28: #{spectral_norm_conv2d_forward.2} parent=1 // pred_region
      %s284 = ssub.s32 16, 16
      %285 = vsyncadd [#allocation5], %s284
      %s287 = sshll.u32 [#allocation6], 4
      %s288 = int_to_ptr.vmem [resolvable:$true] %s287
      %290 = dma.vmem_to_hbm [thread:$0]  %s288, 16, %s6, [#allocation5]
    $region29: #{spectral_norm_conv2d_forward.2} parent=1 // pred_fallthru
      _
    // Predicated region
    $region30: #{spectral_norm_conv2d_forward.2} parent=1 // pred_check
      _
    $region31: #{spectral_norm_conv2d_forward.2} parent=1 // pred_check_branch
      %292 = sbr.rel (0) target = $region33
    $region32: #{spectral_norm_conv2d_forward.2} parent=1 // pred_region
      %293 = dma.done [#allocation3], 16
    $region33: #{spectral_norm_conv2d_forward.2} parent=1 // pred_fallthru
      _
    // Predicated region
    $region34: #{spectral_norm_conv2d_forward.2} parent=1 // pred_check
      _
    $region35: #{spectral_norm_conv2d_forward.2} parent=1 // pred_check_branch
      %295 = sbr.rel (0) target = $region37
    $region36: #{spectral_norm_conv2d_forward.2} parent=1 // pred_region
      %296 = dma.done [#allocation5], 16
    $region37: #{spectral_norm_conv2d_forward.2} parent=1 // pred_fallthru
      _
    // Predicated region
    $region38: #{spectral_norm_conv2d_forward.2} parent=1 // pred_check
      _
    $region39: #{spectral_norm_conv2d_forward.2} parent=1 // pred_check_branch
      %298 = sbr.rel (0) target = $region41
    $region40: #{spectral_norm_conv2d_forward.2} parent=1 // pred_region
      %299 = dma.done [#allocation5], 16
    $region41: #{spectral_norm_conv2d_forward.2} parent=1 // pred_fallthru
      _
    %300 = vsyncpa [#allocation3], 1
    %301 = vsyncpa [#allocation5], 1

// kernel: spectral_norm_conv2d_forward.3
$region0: #{spectral_norm_conv2d_forward.3}
  #allocation0 [shape = 'u32[]', space=smem, size = 0x4, offset = 0x4, fixed_abs, tag = 'smem constant byte address 0x4 - core index']
  #allocation1 [shape = 'u32[144,128]{1,0:T(1,128)}', space=vmem, size = 0x12000, scoped, tag = 'internal scratch']
  #allocation2 [shape = 'f32[16,16,36]{2,1,0:T(8,128)}', space=vmem, size = 0x20000, scoped, tag = 'scratch operand']
  #allocation3 [shape = 'f32[1,1]{1,0:T(1,128)S(1)}', space=vmem, size = 0x200, scoped, tag = 'scoped memory for spectral_norm_conv2d_forward.3']
  %s0 = inlined_call_operand.vmem [shape: f32[2,18,18,4], index: 0, kind: input, shape index: {}]
  %s1 = inlined_call_operand.vmem [shape: f32[36,128], index: 1, kind: input, shape index: {}]
  %s2 = inlined_call_operand.<no memory space> [shape: f32[1,1], index: 2, kind: input, shape index: {}]
  %s3 = inlined_call_operand.vmem [shape: f32[1,128], index: 3, kind: input, shape index: {}]
  %s4 = inlined_call_operand.hbm [shape: f32[2,256,128], index: 4, kind: output, shape index: {}]
  %s5 = sld [smem:[#allocation0]]
  $region49: #{spectral_norm_conv2d_forward.3} parent=0
    _
  %s7 = ssub.s32 1, %s5
  %s8 = scalar_select 0, %s7, %s5
  %v9 = vstv %s2
  %10 = vst [vmem:[#allocation3] sm:$0x1] %v9
  $region1: #{spectral_norm_conv2d_forward.3} parent=0
    #allocation4 [shape = 'u8[262144]{0}', space=vmem, size = 0x40000, scoped, tag = 'output window, operand 0']
    #allocation5 [shape = 's32[2]{0}', space=sflag, size = 0x8, scoped, tag = 'scoped memory for spectral_norm_conv2d_forward.3']
    %11 = vsyncpa [#allocation5], 0
    %s12 = scalar_lea.sflag [#allocation5], 1
    %13 = vsyncpa %s12, 0
    loop: start=0, step=1, limit=4
    $region2: #{spectral_norm_conv2d_forward.3} parent=1 // loop_pre_header
      _
    $region3: #{spectral_norm_conv2d_forward.3} parent=1 // loop_header
      %s15 = sphi 0, %s19
      %p16 = scmp.ge.s32.totalorder %s15, 4
      %s25 = sphi 0, %s27
      %s28 = sphi 0, %s25
      %s29 = sphi 0, %s28
      %s45 = sphi 0, %s29
      %s49 = sphi 0, %s49
      %s51 = sphi 0, %s49
      %s52 = sphi 0, %s51
      %s66 = sphi 0, %s52
      %s70 = sphi 0, %s70
      %s72 = sphi 0, %s70
      %s73 = sphi 0, %s72
      %s87 = sphi 0, %s73
      %s91 = sphi 0, %s91
      %s93 = sphi 0, %s91
      %s94 = sphi 0, %s93
      %s108 = sphi 0, %s94
      %s114 = sphi 0, %s116
      %s117 = sphi 0, %s114
      %s118 = sphi 0, %s117
      %s134 = sphi 0, %s118
    $region4: #{spectral_norm_conv2d_forward.3} parent=1 // loop_header_branch
      %18 = sbr.rel (%p16) target = $region8
    $region5: #{spectral_norm_conv2d_forward.3} parent=1 // loop_body
      %s20 = ssub.s32 %s15, 1
      %s21 = ssub.s32 %s15, 2
      %s22 = sadd.s32 %s15, 1
      %s23 = ssub.s32 %s15, %s22
      %p24 = scmp.eq.s32.totalorder %s23, 0
      %s26 = sadd.s32 %s25, 1
      %s27 = scalar_select %p24, %s25, %s26
      %p30 = pneg %p24
      %p31 = scmp.eq.s32.totalorder %s15, 1
      %p32 = por %p30, %p31
      %p33 = scmp.ne.s32.totalorder %s25, %s28
      %p34 = scmp.eq.s32.totalorder %s15, 0
      %p35 = por %p33, %p34
      %p36 = scmp.ne.s32.totalorder %s25, %s28
      %p37 = scmp.eq.s32.totalorder %s20, 1
      %p38 = por %p36, %p37
      %p39 = scmp.ne.s32.totalorder %s28, %s29
      %p40 = scmp.eq.s32.totalorder %s20, 0
      %p41 = por %p39, %p40
      %p42 = scmp.ne.s32.totalorder %s28, %s29
      %p43 = scmp.eq.s32.totalorder %s21, 1
      %p44 = por %p42, %p43
      %p46 = scmp.ne.s32.totalorder %s29, %s45
      %p47 = scmp.eq.s32.totalorder %s21, 0
      %p48 = por %p46, %p47
      %s50 = sadd.s32 %s49, 1
      %p53 = scmp.eq.s32.totalorder %s15, 1
      %p54 = scmp.ne.s32.totalorder %s49, %s51
      %p55 = scmp.eq.s32.totalorder %s15, 0
      %p56 = por %p54, %p55
      %p57 = scmp.ne.s32.totalorder %s49, %s51
      %p58 = scmp.eq.s32.totalorder %s20, 1
      %p59 = por %p57, %p58
      %p60 = scmp.ne.s32.totalorder %s51, %s52
      %p61 = scmp.eq.s32.totalorder %s20, 0
      %p62 = por %p60, %p61
      %p63 = scmp.ne.s32.totalorder %s51, %s52
      %p64 = scmp.eq.s32.totalorder %s21, 1
      %p65 = por %p63, %p64
      %p67 = scmp.ne.s32.totalorder %s52, %s66
      %p68 = scmp.eq.s32.totalorder %s21, 0
      %p69 = por %p67, %p68
      %s71 = sadd.s32 %s70, 1
      %p74 = scmp.eq.s32.totalorder %s15, 1
      %p75 = scmp.ne.s32.totalorder %s70, %s72
      %p76 = scmp.eq.s32.totalorder %s15, 0
      %p77 = por %p75, %p76
      %p78 = scmp.ne.s32.totalorder %s70, %s72
      %p79 = scmp.eq.s32.totalorder %s20, 1
      %p80 = por %p78, %p79
      %p81 = scmp.ne.s32.totalorder %s72, %s73
      %p82 = scmp.eq.s32.totalorder %s20, 0
      %p83 = por %p81, %p82
      %p84 = scmp.ne.s32.totalorder %s72, %s73
      %p85 = scmp.eq.s32.totalorder %s21, 1
      %p86 = por %p84, %p85
      %p88 = scmp.ne.s32.totalorder %s73, %s87
      %p89 = scmp.eq.s32.totalorder %s21, 0
      %p90 = por %p88, %p89
      %s92 = sadd.s32 %s91, 1
      %p95 = scmp.eq.s32.totalorder %s15, 1
      %p96 = scmp.ne.s32.totalorder %s91, %s93
      %p97 = scmp.eq.s32.totalorder %s15, 0
      %p98 = por %p96, %p97
      %p99 = scmp.ne.s32.totalorder %s91, %s93
      %p100 = scmp.eq.s32.totalorder %s20, 1
      %p101 = por %p99, %p100
      %p102 = scmp.ne.s32.totalorder %s93, %s94
      %p103 = scmp.eq.s32.totalorder %s20, 0
      %p104 = por %p102, %p103
      %p105 = scmp.ne.s32.totalorder %s93, %s94
      %p106 = scmp.eq.s32.totalorder %s21, 1
      %p107 = por %p105, %p106
      %p109 = scmp.ne.s32.totalorder %s94, %s108
      %p110 = scmp.eq.s32.totalorder %s21, 0
      %p111 = por %p109, %p110
      %s112 = ssub.s32 %s15, %s22
      %p113 = scmp.eq.s32.totalorder %s112, 0
      %s115 = sadd.s32 %s114, 1
      %s116 = scalar_select %p113, %s114, %s115
      %p119 = pneg %p113
      %p120 = scmp.eq.s32.totalorder %s15, 1
      %p121 = por %p119, %p120
      %p122 = scmp.ne.s32.totalorder %s114, %s117
      %p123 = scmp.eq.s32.totalorder %s15, 0
      %p124 = por %p122, %p123
      %p125 = scmp.ne.s32.totalorder %s114, %s117
      %p126 = scmp.eq.s32.totalorder %s20, 1
      %p127 = por %p125, %p126
      %p128 = scmp.ne.s32.totalorder %s117, %s118
      %p129 = scmp.eq.s32.totalorder %s20, 0
      %p130 = por %p128, %p129
      %p131 = scmp.ne.s32.totalorder %s117, %s118
      %p132 = scmp.eq.s32.totalorder %s21, 1
      %p133 = por %p131, %p132
      %p135 = scmp.ne.s32.totalorder %s118, %s134
      %p136 = scmp.eq.s32.totalorder %s21, 0
      %p137 = por %p135, %p136
      %p138 = scmp.le.s32.totalorder 1, %s15
      %p139 = scmp.lt.s32.totalorder %s15, 3
      %p140 = pnand %p138, %p139
      %p141 = pneg %p140
      // Predicated region
      $region9: #{spectral_norm_conv2d_forward.3} parent=5 // pred_check
        _
      $region10: #{spectral_norm_conv2d_forward.3} parent=5 // pred_check_branch
        %143 = sbr.rel (%p140) target = $region12
      $region11: #{spectral_norm_conv2d_forward.3} parent=5 // pred_region
        %s144 = ssub.s32 %s15, 1
        // Predicated region
        $region13: #{spectral_norm_conv2d_forward.3} parent=11 // pred_check
          %p145 = pneg %p62
        $region14: #{spectral_norm_conv2d_forward.3} parent=11 // pred_check_branch
          %147 = sbr.rel (%p145) target = $region16
        $region15: #{spectral_norm_conv2d_forward.3} parent=11 // pred_region
          _
        $region16: #{spectral_norm_conv2d_forward.3} parent=11 // pred_fallthru
          _
        // Predicated region
        $region17: #{spectral_norm_conv2d_forward.3} parent=11 // pred_check
          %p148 = pneg %p83
        $region18: #{spectral_norm_conv2d_forward.3} parent=11 // pred_check_branch
          %150 = sbr.rel (%p148) target = $region20
        $region19: #{spectral_norm_conv2d_forward.3} parent=11 // pred_region
          _
        $region20: #{spectral_norm_conv2d_forward.3} parent=11 // pred_fallthru
          _
        // Predicated region
        $region21: #{spectral_norm_conv2d_forward.3} parent=11 // pred_check
          %p151 = pneg %p104
        $region22: #{spectral_norm_conv2d_forward.3} parent=11 // pred_check_branch
          %153 = sbr.rel (%p151) target = $region24
        $region23: #{spectral_norm_conv2d_forward.3} parent=11 // pred_region
          _
        $region24: #{spectral_norm_conv2d_forward.3} parent=11 // pred_fallthru
          _
      $region12: #{spectral_norm_conv2d_forward.3} parent=5 // pred_fallthru
        _
      %p154 = scmp.lt.s32.totalorder %s15, 2
      // Predicated region
      $region25: #{spectral_norm_conv2d_forward.3} parent=5 // pred_check
        %p155 = pneg %p154
      $region26: #{spectral_norm_conv2d_forward.3} parent=5 // pred_check_branch
        %157 = sbr.rel (%p155) target = $region28
      $region27: #{spectral_norm_conv2d_forward.3} parent=5 // pred_region
        // Predicated region
        $region29: #{spectral_norm_conv2d_forward.3} parent=27 // pred_check
          %p158 = pneg %p35
        $region30: #{spectral_norm_conv2d_forward.3} parent=27 // pred_check_branch
          %160 = sbr.rel (%p158) target = $region32
        $region31: #{spectral_norm_conv2d_forward.3} parent=27 // pred_region
          %p161 = scmp.lt.s32.totalorder %s15, 1
          %s162 = scalar_select %p161, %s15, 1
          %s163 = smul.addr %s162, 54
          %s164 = smul.addr %s163, 8
          %s165 = scalar_lea.vmem %s0, %s164
        $region32: #{spectral_norm_conv2d_forward.3} parent=27 // pred_fallthru
          _
      $region28: #{spectral_norm_conv2d_forward.3} parent=5 // pred_fallthru
        _
      %p166 = scmp.le.s32.totalorder 1, %s15
      %p167 = scmp.lt.s32.totalorder %s15, 3
      %p168 = pnand %p166, %p167
      %p169 = pneg %p168
      // Predicated region
      $region33: #{spectral_norm_conv2d_forward.3} parent=5 // pred_check
        _
      $region34: #{spectral_norm_conv2d_forward.3} parent=5 // pred_check_branch
        %171 = sbr.rel (%p168) target = $region36
      $region35: #{spectral_norm_conv2d_forward.3} parent=5 // pred_region
        %s172 = ssub.s32 %s15, 1
        %p173 = scmp.lt.s32.totalorder %s20, 1
        %s174 = scalar_select %p173, %s20, 1
        %s175 = smul.addr %s174, 54
        %s176 = smul.addr %s175, 8
        %s177 = scalar_lea.vmem %s0, %s176
        %p178 = pneg %p41
        %p179 = pneg %p38
        %p180 = pneg %p62
        %p181 = pneg %p59
        %p182 = pneg %p83
        %p183 = pneg %p80
        %p184 = pneg %p104
        %p185 = pneg %p101
        %p186 = pneg %p130
        %p187 = pneg %p127
        %s188 = sand.u32 %s117, 1
        %s189 = scalar_lea.sflag [#allocation5], %s188
        %s190 = sand.u32 %s117, 1
        %s191 = smul.addr %s190, 256
        %s192 = scalar_lea.vmem [#allocation4], %s191
        %p193 = scmp.lt.s32.totalorder %s20, 1
        %s194 = scalar_select %p193, %s20, 1
        %s195 = smul.addr %s194, 54
        %s196 = smul.addr %s195, 8
        %s197 = scalar_lea.vmem %s0, %s196
        %v198 = vld [vmem:[%s197] sm:$0xff]
        %v199 = vld [vmem:[%s197 + $0x8] sm:$0xff]
        %v200 = vld [vmem:[%s197 + $0x18] sm:$0xff]
        %v201 = vld [vmem:[%s197 + $0x20] sm:$0xff]
        %v202 = vld [vmem:[%s197 + $0x30] sm:$0xff]
        %v203 = vld [vmem:[%s197 + $0x38] sm:$0xff]
        %v204 = vld [vmem:[%s197 + $0x48] sm:$0xff]
        %v205 = vld [vmem:[%s197 + $0x50] sm:$0xff]
        %v206 = vld [vmem:[%s197 + $0x60] sm:$0xff]
        %v207 = vld [vmem:[%s197 + $0x68] sm:$0xff]
        %v208 = vld [vmem:[%s197 + $0x78] sm:$0xff]
        %v209 = vld [vmem:[%s197 + $0x80] sm:$0xff]
        %v210 = vld [vmem:[%s197 + $0x90] sm:$0xff]
        %v211 = vld [vmem:[%s197 + $0x98] sm:$0xff]
        %v212 = vld [vmem:[%s197 + $0xa8] sm:$0xff]
        %v213 = vld [vmem:[%s197 + $0xb0] sm:$0xff]
        %v214 = vld [vmem:[%s197 + $0xc0] sm:$0xff]
        %v215 = vld [vmem:[%s197 + $0xc8] sm:$0xff]
        %v216 = vld [vmem:[%s197 + $0xd8] sm:$0xff]
        %v217 = vld [vmem:[%s197 + $0xe0] sm:$0xff]
        %v218 = vld [vmem:[%s197 + $0xf0] sm:$0xff]
        %v219 = vld [vmem:[%s197 + $0xf8] sm:$0xff]
        %v220 = vld [vmem:[%s197 + $0x108] sm:$0xff]
        %v221 = vld [vmem:[%s197 + $0x110] sm:$0xff]
        %v222 = vld [vmem:[%s197 + $0x120] sm:$0xff]
        %v223 = vld [vmem:[%s197 + $0x128] sm:$0xff]
        %v224 = vld [vmem:[%s197 + $0x138] sm:$0xff]
        %v225 = vld [vmem:[%s197 + $0x140] sm:$0xff]
        %v226 = vld [vmem:[%s197 + $0x150] sm:$0xff]
        %v227 = vld [vmem:[%s197 + $0x158] sm:$0xff]
        %v228 = vld [vmem:[%s197 + $0x168] sm:$0xff]
        %v229 = vld [vmem:[%s197 + $0x170] sm:$0xff]
        %vm230 = vcmask 31744
        %231 = vst.msk [vmem:[#allocation2] sm:$0xff] %vm230, %v198
        %232 = vst.msk [vmem:[#allocation2 + $0x8] sm:$0xff] %vm230, %v199
        %233 = vst.msk [vmem:[#allocation2 + $0x10] sm:$0xff] %vm230, %v200
        %234 = vst.msk [vmem:[#allocation2 + $0x18] sm:$0xff] %vm230, %v201
        %235 = vst.msk [vmem:[#allocation2 + $0x20] sm:$0xff] %vm230, %v202
        %236 = vst.msk [vmem:[#allocation2 + $0x28] sm:$0xff] %vm230, %v203
        %237 = vst.msk [vmem:[#allocation2 + $0x30] sm:$0xff] %vm230, %v204
        %238 = vst.msk [vmem:[#allocation2 + $0x38] sm:$0xff] %vm230, %v205
        %239 = vst.msk [vmem:[#allocation2 + $0x40] sm:$0xff] %vm230, %v206
        %240 = vst.msk [vmem:[#allocation2 + $0x48] sm:$0xff] %vm230, %v207
        %241 = vst.msk [vmem:[#allocation2 + $0x50] sm:$0xff] %vm230, %v208
        %242 = vst.msk [vmem:[#allocation2 + $0x58] sm:$0xff] %vm230, %v209
        %243 = vst.msk [vmem:[#allocation2 + $0x60] sm:$0xff] %vm230, %v210
        %244 = vst.msk [vmem:[#allocation2 + $0x68] sm:$0xff] %vm230, %v211
        %245 = vst.msk [vmem:[#allocation2 + $0x70] sm:$0xff] %vm230, %v212
        %246 = vst.msk [vmem:[#allocation2 + $0x78] sm:$0xff] %vm230, %v213
        %247 = vst.msk [vmem:[#allocation2 + $0x80] sm:$0xff] %vm230, %v214
        %248 = vst.msk [vmem:[#allocation2 + $0x88] sm:$0xff] %vm230, %v215
        %249 = vst.msk [vmem:[#allocation2 + $0x90] sm:$0xff] %vm230, %v216
        %250 = vst.msk [vmem:[#allocation2 + $0x98] sm:$0xff] %vm230, %v217
        %251 = vst.msk [vmem:[#allocation2 + $0xa0] sm:$0xff] %vm230, %v218
        %252 = vst.msk [vmem:[#allocation2 + $0xa8] sm:$0xff] %vm230, %v219
        %253 = vst.msk [vmem:[#allocation2 + $0xb0] sm:$0xff] %vm230, %v220
        %254 = vst.msk [vmem:[#allocation2 + $0xb8] sm:$0xff] %vm230, %v221
        %255 = vst.msk [vmem:[#allocation2 + $0xc0] sm:$0xff] %vm230, %v222
        %256 = vst.msk [vmem:[#allocation2 + $0xc8] sm:$0xff] %vm230, %v223
        %257 = vst.msk [vmem:[#allocation2 + $0xd0] sm:$0xff] %vm230, %v224
        %258 = vst.msk [vmem:[#allocation2 + $0xd8] sm:$0xff] %vm230, %v225
        %259 = vst.msk [vmem:[#allocation2 + $0xe0] sm:$0xff] %vm230, %v226
        %260 = vst.msk [vmem:[#allocation2 + $0xe8] sm:$0xff] %vm230, %v227
        %261 = vst.msk [vmem:[#allocation2 + $0xf0] sm:$0xff] %vm230, %v228
        %262 = vst.msk [vmem:[#allocation2 + $0xf8] sm:$0xff] %vm230, %v229
        %v263 = vld [vmem:[%s197 + $0x1] sm:$0xff]
        %v264 = vld [vmem:[%s197 + $0x9] sm:$0xff]
        %v265 = vld [vmem:[%s197 + $0x19] sm:$0xff]
        %v266 = vld [vmem:[%s197 + $0x21] sm:$0xff]
        %v267 = vld [vmem:[%s197 + $0x31] sm:$0xff]
        %v268 = vld [vmem:[%s197 + $0x39] sm:$0xff]
        %v269 = vld [vmem:[%s197 + $0x49] sm:$0xff]
        %v270 = vld [vmem:[%s197 + $0x51] sm:$0xff]
        %v271 = vld [vmem:[%s197 + $0x61] sm:$0xff]
        %v272 = vld [vmem:[%s197 + $0x69] sm:$0xff]
        %v273 = vld [vmem:[%s197 + $0x79] sm:$0xff]
        %v274 = vld [vmem:[%s197 + $0x81] sm:$0xff]
        %v275 = vld [vmem:[%s197 + $0x91] sm:$0xff]
        %v276 = vld [vmem:[%s197 + $0x99] sm:$0xff]
        %v277 = vld [vmem:[%s197 + $0xa9] sm:$0xff]
        %v278 = vld [vmem:[%s197 + $0xb1] sm:$0xff]
        %v279 = vld [vmem:[%s197 + $0xc1] sm:$0xff]
        %v280 = vld [vmem:[%s197 + $0xc9] sm:$0xff]
        %v281 = vld [vmem:[%s197 + $0xd9] sm:$0xff]
        %v282 = vld [vmem:[%s197 + $0xe1] sm:$0xff]
        %v283 = vld [vmem:[%s197 + $0xf1] sm:$0xff]
        %v284 = vld [vmem:[%s197 + $0xf9] sm:$0xff]
        %v285 = vld [vmem:[%s197 + $0x109] sm:$0xff]
        %v286 = vld [vmem:[%s197 + $0x111] sm:$0xff]
        %v287 = vld [vmem:[%s197 + $0x121] sm:$0xff]
        %v288 = vld [vmem:[%s197 + $0x129] sm:$0xff]
        %v289 = vld [vmem:[%s197 + $0x139] sm:$0xff]
        %v290 = vld [vmem:[%s197 + $0x141] sm:$0xff]
        %v291 = vld [vmem:[%s197 + $0x151] sm:$0xff]
        %v292 = vld [vmem:[%s197 + $0x159] sm:$0xff]
        %v293 = vld [vmem:[%s197 + $0x169] sm:$0xff]
        %v294 = vld [vmem:[%s197 + $0x171] sm:$0xff]
        %327 = vrot.lane.b32.xlu0 %v263, 4
        %v328 = vpop.permute.xlu0 %327
        %329 = vrot.lane.b32.xlu0 %v264, 4
        %v330 = vpop.permute.xlu0 %329
        %331 = vrot.lane.b32.xlu0 %v265, 4
        %v332 = vpop.permute.xlu0 %331
        %333 = vrot.lane.b32.xlu0 %v266, 4
        %v334 = vpop.permute.xlu0 %333
        %335 = vrot.lane.b32.xlu0 %v267, 4
        %v336 = vpop.permute.xlu0 %335
        %337 = vrot.lane.b32.xlu0 %v268, 4
        %v338 = vpop.permute.xlu0 %337
        %339 = vrot.lane.b32.xlu0 %v269, 4
        %v340 = vpop.permute.xlu0 %339
        %341 = vrot.lane.b32.xlu0 %v270, 4
        %v342 = vpop.permute.xlu0 %341
        %343 = vrot.lane.b32.xlu0 %v271, 4
        %v344 = vpop.permute.xlu0 %343
        %345 = vrot.lane.b32.xlu0 %v272, 4
        %v346 = vpop.permute.xlu0 %345
        %347 = vrot.lane.b32.xlu0 %v273, 4
        %v348 = vpop.permute.xlu0 %347
        %349 = vrot.lane.b32.xlu0 %v274, 4
        %v350 = vpop.permute.xlu0 %349
        %351 = vrot.lane.b32.xlu0 %v275, 4
        %v352 = vpop.permute.xlu0 %351
        %353 = vrot.lane.b32.xlu0 %v276, 4
        %v354 = vpop.permute.xlu0 %353
        %355 = vrot.lane.b32.xlu0 %v277, 4
        %v356 = vpop.permute.xlu0 %355
        %357 = vrot.lane.b32.xlu0 %v278, 4
        %v358 = vpop.permute.xlu0 %357
        %359 = vrot.lane.b32.xlu0 %v279, 4
        %v360 = vpop.permute.xlu0 %359
        %361 = vrot.lane.b32.xlu0 %v280, 4
        %v362 = vpop.permute.xlu0 %361
        %363 = vrot.lane.b32.xlu0 %v281, 4
        %v364 = vpop.permute.xlu0 %363
        %365 = vrot.lane.b32.xlu0 %v282, 4
        %v366 = vpop.permute.xlu0 %365
        %367 = vrot.lane.b32.xlu0 %v283, 4
        %v368 = vpop.permute.xlu0 %367
        %369 = vrot.lane.b32.xlu0 %v284, 4
        %v370 = vpop.permute.xlu0 %369
        %371 = vrot.lane.b32.xlu0 %v285, 4
        %v372 = vpop.permute.xlu0 %371
        %373 = vrot.lane.b32.xlu0 %v286, 4
        %v374 = vpop.permute.xlu0 %373
        %375 = vrot.lane.b32.xlu0 %v287, 4
        %v376 = vpop.permute.xlu0 %375
        %377 = vrot.lane.b32.xlu0 %v288, 4
        %v378 = vpop.permute.xlu0 %377
        %379 = vrot.lane.b32.xlu0 %v289, 4
        %v380 = vpop.permute.xlu0 %379
        %381 = vrot.lane.b32.xlu0 %v290, 4
        %v382 = vpop.permute.xlu0 %381
        %383 = vrot.lane.b32.xlu0 %v291, 4
        %v384 = vpop.permute.xlu0 %383
        %385 = vrot.lane.b32.xlu0 %v292, 4
        %v386 = vpop.permute.xlu0 %385
        %387 = vrot.lane.b32.xlu0 %v293, 4
        %v388 = vpop.permute.xlu0 %387
        %389 = vrot.lane.b32.xlu0 %v294, 4
        %v390 = vpop.permute.xlu0 %389
        %vm423 = vcmask 64544
        %424 = vst.msk [vmem:[#allocation2] sm:$0xff] %vm423, %v328
        %425 = vst.msk [vmem:[#allocation2 + $0x8] sm:$0xff] %vm423, %v330
        %426 = vst.msk [vmem:[#allocation2 + $0x10] sm:$0xff] %vm423, %v332
        %427 = vst.msk [vmem:[#allocation2 + $0x18] sm:$0xff] %vm423, %v334
        %428 = vst.msk [vmem:[#allocation2 + $0x20] sm:$0xff] %vm423, %v336
        %429 = vst.msk [vmem:[#allocation2 + $0x28] sm:$0xff] %vm423, %v338
        %430 = vst.msk [vmem:[#allocation2 + $0x30] sm:$0xff] %vm423, %v340
        %431 = vst.msk [vmem:[#allocation2 + $0x38] sm:$0xff] %vm423, %v342
        %432 = vst.msk [vmem:[#allocation2 + $0x40] sm:$0xff] %vm423, %v344
        %433 = vst.msk [vmem:[#allocation2 + $0x48] sm:$0xff] %vm423, %v346
        %434 = vst.msk [vmem:[#allocation2 + $0x50] sm:$0xff] %vm423, %v348
        %435 = vst.msk [vmem:[#allocation2 + $0x58] sm:$0xff] %vm423, %v350
        %436 = vst.msk [vmem:[#allocation2 + $0x60] sm:$0xff] %vm423, %v352
        %437 = vst.msk [vmem:[#allocation2 + $0x68] sm:$0xff] %vm423, %v354
        %438 = vst.msk [vmem:[#allocation2 + $0x70] sm:$0xff] %vm423, %v356
        %439 = vst.msk [vmem:[#allocation2 + $0x78] sm:$0xff] %vm423, %v358
        %440 = vst.msk [vmem:[#allocation2 + $0x80] sm:$0xff] %vm423, %v360
        %441 = vst.msk [vmem:[#allocation2 + $0x88] sm:$0xff] %vm423, %v362
        %442 = vst.msk [vmem:[#allocation2 + $0x90] sm:$0xff] %vm423, %v364
        %443 = vst.msk [vmem:[#allocation2 + $0x98] sm:$0xff] %vm423, %v366
        %444 = vst.msk [vmem:[#allocation2 + $0xa0] sm:$0xff] %vm423, %v368
        %445 = vst.msk [vmem:[#allocation2 + $0xa8] sm:$0xff] %vm423, %v370
        %446 = vst.msk [vmem:[#allocation2 + $0xb0] sm:$0xff] %vm423, %v372
        %447 = vst.msk [vmem:[#allocation2 + $0xb8] sm:$0xff] %vm423, %v374
        %448 = vst.msk [vmem:[#allocation2 + $0xc0] sm:$0xff] %vm423, %v376
        %449 = vst.msk [vmem:[#allocation2 + $0xc8] sm:$0xff] %vm423, %v378
        %450 = vst.msk [vmem:[#allocation2 + $0xd0] sm:$0xff] %vm423, %v380
        %451 = vst.msk [vmem:[#allocation2 + $0xd8] sm:$0xff] %vm423, %v382
        %452 = vst.msk [vmem:[#allocation2 + $0xe0] sm:$0xff] %vm423, %v384
        %453 = vst.msk [vmem:[#allocation2 + $0xe8] sm:$0xff] %vm423, %v386
        %454 = vst.msk [vmem:[#allocation2 + $0xf0] sm:$0xff] %vm423, %v388
        %455 = vst.msk [vmem:[#allocation2 + $0xf8] sm:$0xff] %vm423, %v390
        %v456 = vld [vmem:[%s197 + $0x2] sm:$0xff]
        %v457 = vld [vmem:[%s197 + $0xa] sm:$0xff]
        %v458 = vld [vmem:[%s197 + $0x1a] sm:$0xff]
        %v459 = vld [vmem:[%s197 + $0x22] sm:$0xff]
        %v460 = vld [vmem:[%s197 + $0x32] sm:$0xff]
        %v461 = vld [vmem:[%s197 + $0x3a] sm:$0xff]
        %v462 = vld [vmem:[%s197 + $0x4a] sm:$0xff]
        %v463 = vld [vmem:[%s197 + $0x52] sm:$0xff]
        %v464 = vld [vmem:[%s197 + $0x62] sm:$0xff]
        %v465 = vld [vmem:[%s197 + $0x6a] sm:$0xff]
        %v466 = vld [vmem:[%s197 + $0x7a] sm:$0xff]
        %v467 = vld [vmem:[%s197 + $0x82] sm:$0xff]
        %v468 = vld [vmem:[%s197 + $0x92] sm:$0xff]
        %v469 = vld [vmem:[%s197 + $0x9a] sm:$0xff]
        %v470 = vld [vmem:[%s197 + $0xaa] sm:$0xff]
        %v471 = vld [vmem:[%s197 + $0xb2] sm:$0xff]
        %v472 = vld [vmem:[%s197 + $0xc2] sm:$0xff]
        %v473 = vld [vmem:[%s197 + $0xca] sm:$0xff]
        %v474 = vld [vmem:[%s197 + $0xda] sm:$0xff]
        %v475 = vld [vmem:[%s197 + $0xe2] sm:$0xff]
        %v476 = vld [vmem:[%s197 + $0xf2] sm:$0xff]
        %v477 = vld [vmem:[%s197 + $0xfa] sm:$0xff]
        %v478 = vld [vmem:[%s197 + $0x10a] sm:$0xff]
        %v479 = vld [vmem:[%s197 + $0x112] sm:$0xff]
        %v480 = vld [vmem:[%s197 + $0x122] sm:$0xff]
        %v481 = vld [vmem:[%s197 + $0x12a] sm:$0xff]
        %v482 = vld [vmem:[%s197 + $0x13a] sm:$0xff]
        %v483 = vld [vmem:[%s197 + $0x142] sm:$0xff]
        %v484 = vld [vmem:[%s197 + $0x152] sm:$0xff]
        %v485 = vld [vmem:[%s197 + $0x15a] sm:$0xff]
        %v486 = vld [vmem:[%s197 + $0x16a] sm:$0xff]
        %v487 = vld [vmem:[%s197 + $0x172] sm:$0xff]
        %520 = vrot.lane.b32.xlu0 %v456, 8
        %v521 = vpop.permute.xlu0 %520
        %522 = vrot.lane.b32.xlu0 %v457, 8
        %v523 = vpop.permute.xlu0 %522
        %524 = vrot.lane.b32.xlu0 %v458, 8
        %v525 = vpop.permute.xlu0 %524
        %526 = vrot.lane.b32.xlu0 %v459, 8
        %v527 = vpop.permute.xlu0 %526
        %528 = vrot.lane.b32.xlu0 %v460, 8
        %v529 = vpop.permute.xlu0 %528
        %530 = vrot.lane.b32.xlu0 %v461, 8
        %v531 = vpop.permute.xlu0 %530
        %532 = vrot.lane.b32.xlu0 %v462, 8
        %v533 = vpop.permute.xlu0 %532
        %534 = vrot.lane.b32.xlu0 %v463, 8
        %v535 = vpop.permute.xlu0 %534
        %536 = vrot.lane.b32.xlu0 %v464, 8
        %v537 = vpop.permute.xlu0 %536
        %538 = vrot.lane.b32.xlu0 %v465, 8
        %v539 = vpop.permute.xlu0 %538
        %540 = vrot.lane.b32.xlu0 %v466, 8
        %v541 = vpop.permute.xlu0 %540
        %542 = vrot.lane.b32.xlu0 %v467, 8
        %v543 = vpop.permute.xlu0 %542
        %544 = vrot.lane.b32.xlu0 %v468, 8
        %v545 = vpop.permute.xlu0 %544
        %546 = vrot.lane.b32.xlu0 %v469, 8
        %v547 = vpop.permute.xlu0 %546
        %548 = vrot.lane.b32.xlu0 %v470, 8
        %v549 = vpop.permute.xlu0 %548
        %550 = vrot.lane.b32.xlu0 %v471, 8
        %v551 = vpop.permute.xlu0 %550
        %552 = vrot.lane.b32.xlu0 %v472, 8
        %v553 = vpop.permute.xlu0 %552
        %554 = vrot.lane.b32.xlu0 %v473, 8
        %v555 = vpop.permute.xlu0 %554
        %556 = vrot.lane.b32.xlu0 %v474, 8
        %v557 = vpop.permute.xlu0 %556
        %558 = vrot.lane.b32.xlu0 %v475, 8
        %v559 = vpop.permute.xlu0 %558
        %560 = vrot.lane.b32.xlu0 %v476, 8
        %v561 = vpop.permute.xlu0 %560
        %562 = vrot.lane.b32.xlu0 %v477, 8
        %v563 = vpop.permute.xlu0 %562
        %564 = vrot.lane.b32.xlu0 %v478, 8
        %v565 = vpop.permute.xlu0 %564
        %566 = vrot.lane.b32.xlu0 %v479, 8
        %v567 = vpop.permute.xlu0 %566
        %568 = vrot.lane.b32.xlu0 %v480, 8
        %v569 = vpop.permute.xlu0 %568
        %570 = vrot.lane.b32.xlu0 %v481, 8
        %v571 = vpop.permute.xlu0 %570
        %572 = vrot.lane.b32.xlu0 %v482, 8
        %v573 = vpop.permute.xlu0 %572
        %574 = vrot.lane.b32.xlu0 %v483, 8
        %v575 = vpop.permute.xlu0 %574
        %576 = vrot.lane.b32.xlu0 %v484, 8
        %v577 = vpop.permute.xlu0 %576
        %578 = vrot.lane.b32.xlu0 %v485, 8
        %v579 = vpop.permute.xlu0 %578
        %580 = vrot.lane.b32.xlu0 %v486, 8
        %v581 = vpop.permute.xlu0 %580
        %582 = vrot.lane.b32.xlu0 %v487, 8
        %v583 = vpop.permute.xlu0 %582
        %vm616 = vcmask 97344
        %617 = vst.msk [vmem:[#allocation2] sm:$0xff] %vm616, %v521
        %618 = vst.msk [vmem:[#allocation2 + $0x8] sm:$0xff] %vm616, %v523
        %619 = vst.msk [vmem:[#allocation2 + $0x10] sm:$0xff] %vm616, %v525
        %620 = vst.msk [vmem:[#allocation2 + $0x18] sm:$0xff] %vm616, %v527
        %621 = vst.msk [vmem:[#allocation2 + $0x20] sm:$0xff] %vm616, %v529
        %622 = vst.msk [vmem:[#allocation2 + $0x28] sm:$0xff] %vm616, %v531
        %623 = vst.msk [vmem:[#allocation2 + $0x30] sm:$0xff] %vm616, %v533
        %624 = vst.msk [vmem:[#allocation2 + $0x38] sm:$0xff] %vm616, %v535
        %625 = vst.msk [vmem:[#allocation2 + $0x40] sm:$0xff] %vm616, %v537
        %626 = vst.msk [vmem:[#allocation2 + $0x48] sm:$0xff] %vm616, %v539
        %627 = vst.msk [vmem:[#allocation2 + $0x50] sm:$0xff] %vm616, %v541
        %628 = vst.msk [vmem:[#allocation2 + $0x58] sm:$0xff] %vm616, %v543
        %629 = vst.msk [vmem:[#allocation2 + $0x60] sm:$0xff] %vm616, %v545
        %630 = vst.msk [vmem:[#allocation2 + $0x68] sm:$0xff] %vm616, %v547
        %631 = vst.msk [vmem:[#allocation2 + $0x70] sm:$0xff] %vm616, %v549
        %632 = vst.msk [vmem:[#allocation2 + $0x78] sm:$0xff] %vm616, %v551
        %633 = vst.msk [vmem:[#allocation2 + $0x80] sm:$0xff] %vm616, %v553
        %634 = vst.msk [vmem:[#allocation2 + $0x88] sm:$0xff] %vm616, %v555
        %635 = vst.msk [vmem:[#allocation2 + $0x90] sm:$0xff] %vm616, %v557
        %636 = vst.msk [vmem:[#allocation2 + $0x98] sm:$0xff] %vm616, %v559
        %637 = vst.msk [vmem:[#allocation2 + $0xa0] sm:$0xff] %vm616, %v561
        %638 = vst.msk [vmem:[#allocation2 + $0xa8] sm:$0xff] %vm616, %v563
        %639 = vst.msk [vmem:[#allocation2 + $0xb0] sm:$0xff] %vm616, %v565
        %640 = vst.msk [vmem:[#allocation2 + $0xb8] sm:$0xff] %vm616, %v567
        %641 = vst.msk [vmem:[#allocation2 + $0xc0] sm:$0xff] %vm616, %v569
        %642 = vst.msk [vmem:[#allocation2 + $0xc8] sm:$0xff] %vm616, %v571
        %643 = vst.msk [vmem:[#allocation2 + $0xd0] sm:$0xff] %vm616, %v573
        %644 = vst.msk [vmem:[#allocation2 + $0xd8] sm:$0xff] %vm616, %v575
        %645 = vst.msk [vmem:[#allocation2 + $0xe0] sm:$0xff] %vm616, %v577
        %646 = vst.msk [vmem:[#allocation2 + $0xe8] sm:$0xff] %vm616, %v579
        %647 = vst.msk [vmem:[#allocation2 + $0xf0] sm:$0xff] %vm616, %v581
        %648 = vst.msk [vmem:[#allocation2 + $0xf8] sm:$0xff] %vm616, %v583
        %s649 = scalar_lea.vmem %s197, 24
        %v650 = vld [vmem:[%s649] sm:$0xff]
        %v651 = vld [vmem:[%s649 + $0x8] sm:$0xff]
        %v652 = vld [vmem:[%s649 + $0x18] sm:$0xff]
        %v653 = vld [vmem:[%s649 + $0x20] sm:$0xff]
        %v654 = vld [vmem:[%s649 + $0x30] sm:$0xff]
        %v655 = vld [vmem:[%s649 + $0x38] sm:$0xff]
        %v656 = vld [vmem:[%s649 + $0x48] sm:$0xff]
        %v657 = vld [vmem:[%s649 + $0x50] sm:$0xff]
        %v658 = vld [vmem:[%s649 + $0x60] sm:$0xff]
        %v659 = vld [vmem:[%s649 + $0x68] sm:$0xff]
        %v660 = vld [vmem:[%s649 + $0x78] sm:$0xff]
        %v661 = vld [vmem:[%s649 + $0x80] sm:$0xff]
        %v662 = vld [vmem:[%s649 + $0x90] sm:$0xff]
        %v663 = vld [vmem:[%s649 + $0x98] sm:$0xff]
        %v664 = vld [vmem:[%s649 + $0xa8] sm:$0xff]
        %v665 = vld [vmem:[%s649 + $0xb0] sm:$0xff]
        %v666 = vld [vmem:[%s649 + $0xc0] sm:$0xff]
        %v667 = vld [vmem:[%s649 + $0xc8] sm:$0xff]
        %v668 = vld [vmem:[%s649 + $0xd8] sm:$0xff]
        %v669 = vld [vmem:[%s649 + $0xe0] sm:$0xff]
        %v670 = vld [vmem:[%s649 + $0xf0] sm:$0xff]
        %v671 = vld [vmem:[%s649 + $0xf8] sm:$0xff]
        %v672 = vld [vmem:[%s649 + $0x108] sm:$0xff]
        %v673 = vld [vmem:[%s649 + $0x110] sm:$0xff]
        %v674 = vld [vmem:[%s649 + $0x120] sm:$0xff]
        %v675 = vld [vmem:[%s649 + $0x128] sm:$0xff]
        %v676 = vld [vmem:[%s649 + $0x138] sm:$0xff]
        %v677 = vld [vmem:[%s649 + $0x140] sm:$0xff]
        %v678 = vld [vmem:[%s649 + $0x150] sm:$0xff]
        %v679 = vld [vmem:[%s649 + $0x158] sm:$0xff]
        %v680 = vld [vmem:[%s649 + $0x168] sm:$0xff]
        %v681 = vld [vmem:[%s649 + $0x170] sm:$0xff]
        %714 = vrot.lane.b32.xlu0 %v650, 12
        %v715 = vpop.permute.xlu0 %714
        %716 = vrot.lane.b32.xlu0 %v651, 12
        %v717 = vpop.permute.xlu0 %716
        %718 = vrot.lane.b32.xlu0 %v652, 12
        %v719 = vpop.permute.xlu0 %718
        %720 = vrot.lane.b32.xlu0 %v653, 12
        %v721 = vpop.permute.xlu0 %720
        %722 = vrot.lane.b32.xlu0 %v654, 12
        %v723 = vpop.permute.xlu0 %722
        %724 = vrot.lane.b32.xlu0 %v655, 12
        %v725 = vpop.permute.xlu0 %724
        %726 = vrot.lane.b32.xlu0 %v656, 12
        %v727 = vpop.permute.xlu0 %726
        %728 = vrot.lane.b32.xlu0 %v657, 12
        %v729 = vpop.permute.xlu0 %728
        %730 = vrot.lane.b32.xlu0 %v658, 12
        %v731 = vpop.permute.xlu0 %730
        %732 = vrot.lane.b32.xlu0 %v659, 12
        %v733 = vpop.permute.xlu0 %732
        %734 = vrot.lane.b32.xlu0 %v660, 12
        %v735 = vpop.permute.xlu0 %734
        %736 = vrot.lane.b32.xlu0 %v661, 12
        %v737 = vpop.permute.xlu0 %736
        %738 = vrot.lane.b32.xlu0 %v662, 12
        %v739 = vpop.permute.xlu0 %738
        %740 = vrot.lane.b32.xlu0 %v663, 12
        %v741 = vpop.permute.xlu0 %740
        %742 = vrot.lane.b32.xlu0 %v664, 12
        %v743 = vpop.permute.xlu0 %742
        %744 = vrot.lane.b32.xlu0 %v665, 12
        %v745 = vpop.permute.xlu0 %744
        %746 = vrot.lane.b32.xlu0 %v666, 12
        %v747 = vpop.permute.xlu0 %746
        %748 = vrot.lane.b32.xlu0 %v667, 12
        %v749 = vpop.permute.xlu0 %748
        %750 = vrot.lane.b32.xlu0 %v668, 12
        %v751 = vpop.permute.xlu0 %750
        %752 = vrot.lane.b32.xlu0 %v669, 12
        %v753 = vpop.permute.xlu0 %752
        %754 = vrot.lane.b32.xlu0 %v670, 12
        %v755 = vpop.permute.xlu0 %754
        %756 = vrot.lane.b32.xlu0 %v671, 12
        %v757 = vpop.permute.xlu0 %756
        %758 = vrot.lane.b32.xlu0 %v672, 12
        %v759 = vpop.permute.xlu0 %758
        %760 = vrot.lane.b32.xlu0 %v673, 12
        %v761 = vpop.permute.xlu0 %760
        %762 = vrot.lane.b32.xlu0 %v674, 12
        %v763 = vpop.permute.xlu0 %762
        %764 = vrot.lane.b32.xlu0 %v675, 12
        %v765 = vpop.permute.xlu0 %764
        %766 = vrot.lane.b32.xlu0 %v676, 12
        %v767 = vpop.permute.xlu0 %766
        %768 = vrot.lane.b32.xlu0 %v677, 12
        %v769 = vpop.permute.xlu0 %768
        %770 = vrot.lane.b32.xlu0 %v678, 12
        %v771 = vpop.permute.xlu0 %770
        %772 = vrot.lane.b32.xlu0 %v679, 12
        %v773 = vpop.permute.xlu0 %772
        %774 = vrot.lane.b32.xlu0 %v680, 12
        %v775 = vpop.permute.xlu0 %774
        %776 = vrot.lane.b32.xlu0 %v681, 12
        %v777 = vpop.permute.xlu0 %776
        %vm810 = vcmask 130144
        %811 = vst.msk [vmem:[#allocation2] sm:$0xff] %vm810, %v715
        %812 = vst.msk [vmem:[#allocation2 + $0x8] sm:$0xff] %vm810, %v717
        %813 = vst.msk [vmem:[#allocation2 + $0x10] sm:$0xff] %vm810, %v719
        %814 = vst.msk [vmem:[#allocation2 + $0x18] sm:$0xff] %vm810, %v721
        %815 = vst.msk [vmem:[#allocation2 + $0x20] sm:$0xff] %vm810, %v723
        %816 = vst.msk [vmem:[#allocation2 + $0x28] sm:$0xff] %vm810, %v725
        %817 = vst.msk [vmem:[#allocation2 + $0x30] sm:$0xff] %vm810, %v727
        %818 = vst.msk [vmem:[#allocation2 + $0x38] sm:$0xff] %vm810, %v729
        %819 = vst.msk [vmem:[#allocation2 + $0x40] sm:$0xff] %vm810, %v731
        %820 = vst.msk [vmem:[#allocation2 + $0x48] sm:$0xff] %vm810, %v733
        %821 = vst.msk [vmem:[#allocation2 + $0x50] sm:$0xff] %vm810, %v735
        %822 = vst.msk [vmem:[#allocation2 + $0x58] sm:$0xff] %vm810, %v737
        %823 = vst.msk [vmem:[#allocation2 + $0x60] sm:$0xff] %vm810, %v739
        %824 = vst.msk [vmem:[#allocation2 + $0x68] sm:$0xff] %vm810, %v741
        %825 = vst.msk [vmem:[#allocation2 + $0x70] sm:$0xff] %vm810, %v743
        %826 = vst.msk [vmem:[#allocation2 + $0x78] sm:$0xff] %vm810, %v745
        %827 = vst.msk [vmem:[#allocation2 + $0x80] sm:$0xff] %vm810, %v747
        %828 = vst.msk [vmem:[#allocation2 + $0x88] sm:$0xff] %vm810, %v749
        %829 = vst.msk [vmem:[#allocation2 + $0x90] sm:$0xff] %vm810, %v751
        %830 = vst.msk [vmem:[#allocation2 + $0x98] sm:$0xff] %vm810, %v753
        %831 = vst.msk [vmem:[#allocation2 + $0xa0] sm:$0xff] %vm810, %v755
        %832 = vst.msk [vmem:[#allocation2 + $0xa8] sm:$0xff] %vm810, %v757
        %833 = vst.msk [vmem:[#allocation2 + $0xb0] sm:$0xff] %vm810, %v759
        %834 = vst.msk [vmem:[#allocation2 + $0xb8] sm:$0xff] %vm810, %v761
        %835 = vst.msk [vmem:[#allocation2 + $0xc0] sm:$0xff] %vm810, %v763
        %836 = vst.msk [vmem:[#allocation2 + $0xc8] sm:$0xff] %vm810, %v765
        %837 = vst.msk [vmem:[#allocation2 + $0xd0] sm:$0xff] %vm810, %v767
        %838 = vst.msk [vmem:[#allocation2 + $0xd8] sm:$0xff] %vm810, %v769
        %839 = vst.msk [vmem:[#allocation2 + $0xe0] sm:$0xff] %vm810, %v771
        %840 = vst.msk [vmem:[#allocation2 + $0xe8] sm:$0xff] %vm810, %v773
        %841 = vst.msk [vmem:[#allocation2 + $0xf0] sm:$0xff] %vm810, %v775
        %842 = vst.msk [vmem:[#allocation2 + $0xf8] sm:$0xff] %vm810, %v777
        %v843 = vld [vmem:[%s649 + $0x1] sm:$0xff]
        %v844 = vld [vmem:[%s649 + $0x9] sm:$0xff]
        %v845 = vld [vmem:[%s649 + $0x19] sm:$0xff]
        %v846 = vld [vmem:[%s649 + $0x21] sm:$0xff]
        %v847 = vld [vmem:[%s649 + $0x31] sm:$0xff]
        %v848 = vld [vmem:[%s649 + $0x39] sm:$0xff]
        %v849 = vld [vmem:[%s649 + $0x49] sm:$0xff]
        %v850 = vld [vmem:[%s649 + $0x51] sm:$0xff]
        %v851 = vld [vmem:[%s649 + $0x61] sm:$0xff]
        %v852 = vld [vmem:[%s649 + $0x69] sm:$0xff]
        %v853 = vld [vmem:[%s649 + $0x79] sm:$0xff]
        %v854 = vld [vmem:[%s649 + $0x81] sm:$0xff]
        %v855 = vld [vmem:[%s649 + $0x91] sm:$0xff]
        %v856 = vld [vmem:[%s649 + $0x99] sm:$0xff]
        %v857 = vld [vmem:[%s649 + $0xa9] sm:$0xff]
        %v858 = vld [vmem:[%s649 + $0xb1] sm:$0xff]
        %v859 = vld [vmem:[%s649 + $0xc1] sm:$0xff]
        %v860 = vld [vmem:[%s649 + $0xc9] sm:$0xff]
        %v861 = vld [vmem:[%s649 + $0xd9] sm:$0xff]
        %v862 = vld [vmem:[%s649 + $0xe1] sm:$0xff]
        %v863 = vld [vmem:[%s649 + $0xf1] sm:$0xff]
        %v864 = vld [vmem:[%s649 + $0xf9] sm:$0xff]
        %v865 = vld [vmem:[%s649 + $0x109] sm:$0xff]
        %v866 = vld [vmem:[%s649 + $0x111] sm:$0xff]
        %v867 = vld [vmem:[%s649 + $0x121] sm:$0xff]
        %v868 = vld [vmem:[%s649 + $0x129] sm:$0xff]
        %v869 = vld [vmem:[%s649 + $0x139] sm:$0xff]
        %v870 = vld [vmem:[%s649 + $0x141] sm:$0xff]
        %v871 = vld [vmem:[%s649 + $0x151] sm:$0xff]
        %v872 = vld [vmem:[%s649 + $0x159] sm:$0xff]
        %v873 = vld [vmem:[%s649 + $0x169] sm:$0xff]
        %v874 = vld [vmem:[%s649 + $0x171] sm:$0xff]
        %907 = vrot.lane.b32.xlu0 %v843, 16
        %v908 = vpop.permute.xlu0 %907
        %909 = vrot.lane.b32.xlu0 %v844, 16
        %v910 = vpop.permute.xlu0 %909
        %911 = vrot.lane.b32.xlu0 %v845, 16
        %v912 = vpop.permute.xlu0 %911
        %913 = vrot.lane.b32.xlu0 %v846, 16
        %v914 = vpop.permute.xlu0 %913
        %915 = vrot.lane.b32.xlu0 %v847, 16
        %v916 = vpop.permute.xlu0 %915
        %917 = vrot.lane.b32.xlu0 %v848, 16
        %v918 = vpop.permute.xlu0 %917
        %919 = vrot.lane.b32.xlu0 %v849, 16
        %v920 = vpop.permute.xlu0 %919
        %921 = vrot.lane.b32.xlu0 %v850, 16
        %v922 = vpop.permute.xlu0 %921
        %923 = vrot.lane.b32.xlu0 %v851, 16
        %v924 = vpop.permute.xlu0 %923
        %925 = vrot.lane.b32.xlu0 %v852, 16
        %v926 = vpop.permute.xlu0 %925
        %927 = vrot.lane.b32.xlu0 %v853, 16
        %v928 = vpop.permute.xlu0 %927
        %929 = vrot.lane.b32.xlu0 %v854, 16
        %v930 = vpop.permute.xlu0 %929
        %931 = vrot.lane.b32.xlu0 %v855, 16
        %v932 = vpop.permute.xlu0 %931
        %933 = vrot.lane.b32.xlu0 %v856, 16
        %v934 = vpop.permute.xlu0 %933
        %935 = vrot.lane.b32.xlu0 %v857, 16
        %v936 = vpop.permute.xlu0 %935
        %937 = vrot.lane.b32.xlu0 %v858, 16
        %v938 = vpop.permute.xlu0 %937
        %939 = vrot.lane.b32.xlu0 %v859, 16
        %v940 = vpop.permute.xlu0 %939
        %941 = vrot.lane.b32.xlu0 %v860, 16
        %v942 = vpop.permute.xlu0 %941
        %943 = vrot.lane.b32.xlu0 %v861, 16
        %v944 = vpop.permute.xlu0 %943
        %945 = vrot.lane.b32.xlu0 %v862, 16
        %v946 = vpop.permute.xlu0 %945
        %947 = vrot.lane.b32.xlu0 %v863, 16
        %v948 = vpop.permute.xlu0 %947
        %949 = vrot.lane.b32.xlu0 %v864, 16
        %v950 = vpop.permute.xlu0 %949
        %951 = vrot.lane.b32.xlu0 %v865, 16
        %v952 = vpop.permute.xlu0 %951
        %953 = vrot.lane.b32.xlu0 %v866, 16
        %v954 = vpop.permute.xlu0 %953
        %955 = vrot.lane.b32.xlu0 %v867, 16
        %v956 = vpop.permute.xlu0 %955
        %957 = vrot.lane.b32.xlu0 %v868, 16
        %v958 = vpop.permute.xlu0 %957
        %959 = vrot.lane.b32.xlu0 %v869, 16
        %v960 = vpop.permute.xlu0 %959
        %961 = vrot.lane.b32.xlu0 %v870, 16
        %v962 = vpop.permute.xlu0 %961
        %963 = vrot.lane.b32.xlu0 %v871, 16
        %v964 = vpop.permute.xlu0 %963
        %965 = vrot.lane.b32.xlu0 %v872, 16
        %v966 = vpop.permute.xlu0 %965
        %967 = vrot.lane.b32.xlu0 %v873, 16
        %v968 = vpop.permute.xlu0 %967
        %969 = vrot.lane.b32.xlu0 %v874, 16
        %v970 = vpop.permute.xlu0 %969
        %vm1003 = vcmask 162944
        %1004 = vst.msk [vmem:[#allocation2] sm:$0xff] %vm1003, %v908
        %1005 = vst.msk [vmem:[#allocation2 + $0x8] sm:$0xff] %vm1003, %v910
        %1006 = vst.msk [vmem:[#allocation2 + $0x10] sm:$0xff] %vm1003, %v912
        %1007 = vst.msk [vmem:[#allocation2 + $0x18] sm:$0xff] %vm1003, %v914
        %1008 = vst.msk [vmem:[#allocation2 + $0x20] sm:$0xff] %vm1003, %v916
        %1009 = vst.msk [vmem:[#allocation2 + $0x28] sm:$0xff] %vm1003, %v918
        %1010 = vst.msk [vmem:[#allocation2 + $0x30] sm:$0xff] %vm1003, %v920
        %1011 = vst.msk [vmem:[#allocation2 + $0x38] sm:$0xff] %vm1003, %v922
        %1012 = vst.msk [vmem:[#allocation2 + $0x40] sm:$0xff] %vm1003, %v924
        %1013 = vst.msk [vmem:[#allocation2 + $0x48] sm:$0xff] %vm1003, %v926
        %1014 = vst.msk [vmem:[#allocation2 + $0x50] sm:$0xff] %vm1003, %v928
        %1015 = vst.msk [vmem:[#allocation2 + $0x58] sm:$0xff] %vm1003, %v930
        %1016 = vst.msk [vmem:[#allocation2 + $0x60] sm:$0xff] %vm1003, %v932
        %1017 = vst.msk [vmem:[#allocation2 + $0x68] sm:$0xff] %vm1003, %v934
        %1018 = vst.msk [vmem:[#allocation2 + $0x70] sm:$0xff] %vm1003, %v936
        %1019 = vst.msk [vmem:[#allocation2 + $0x78] sm:$0xff] %vm1003, %v938
        %1020 = vst.msk [vmem:[#allocation2 + $0x80] sm:$0xff] %vm1003, %v940
        %1021 = vst.msk [vmem:[#allocation2 + $0x88] sm:$0xff] %vm1003, %v942
        %1022 = vst.msk [vmem:[#allocation2 + $0x90] sm:$0xff] %vm1003, %v944
        %1023 = vst.msk [vmem:[#allocation2 + $0x98] sm:$0xff] %vm1003, %v946
        %1024 = vst.msk [vmem:[#allocation2 + $0xa0] sm:$0xff] %vm1003, %v948
        %1025 = vst.msk [vmem:[#allocation2 + $0xa8] sm:$0xff] %vm1003, %v950
        %1026 = vst.msk [vmem:[#allocation2 + $0xb0] sm:$0xff] %vm1003, %v952
        %1027 = vst.msk [vmem:[#allocation2 + $0xb8] sm:$0xff] %vm1003, %v954
        %1028 = vst.msk [vmem:[#allocation2 + $0xc0] sm:$0xff] %vm1003, %v956
        %1029 = vst.msk [vmem:[#allocation2 + $0xc8] sm:$0xff] %vm1003, %v958
        %1030 = vst.msk [vmem:[#allocation2 + $0xd0] sm:$0xff] %vm1003, %v960
        %1031 = vst.msk [vmem:[#allocation2 + $0xd8] sm:$0xff] %vm1003, %v962
        %1032 = vst.msk [vmem:[#allocation2 + $0xe0] sm:$0xff] %vm1003, %v964
        %1033 = vst.msk [vmem:[#allocation2 + $0xe8] sm:$0xff] %vm1003, %v966
        %1034 = vst.msk [vmem:[#allocation2 + $0xf0] sm:$0xff] %vm1003, %v968
        %1035 = vst.msk [vmem:[#allocation2 + $0xf8] sm:$0xff] %vm1003, %v970
        %v1036 = vld [vmem:[%s649 + $0x2] sm:$0xff]
        %v1037 = vld [vmem:[%s649 + $0xa] sm:$0xff]
        %v1038 = vld [vmem:[%s649 + $0x1a] sm:$0xff]
        %v1039 = vld [vmem:[%s649 + $0x22] sm:$0xff]
        %v1040 = vld [vmem:[%s649 + $0x32] sm:$0xff]
        %v1041 = vld [vmem:[%s649 + $0x3a] sm:$0xff]
        %v1042 = vld [vmem:[%s649 + $0x4a] sm:$0xff]
        %v1043 = vld [vmem:[%s649 + $0x52] sm:$0xff]
        %v1044 = vld [vmem:[%s649 + $0x62] sm:$0xff]
        %v1045 = vld [vmem:[%s649 + $0x6a] sm:$0xff]
        %v1046 = vld [vmem:[%s649 + $0x7a] sm:$0xff]
        %v1047 = vld [vmem:[%s649 + $0x82] sm:$0xff]
        %v1048 = vld [vmem:[%s649 + $0x92] sm:$0xff]
        %v1049 = vld [vmem:[%s649 + $0x9a] sm:$0xff]
        %v1050 = vld [vmem:[%s649 + $0xaa] sm:$0xff]
        %v1051 = vld [vmem:[%s649 + $0xb2] sm:$0xff]
        %v1052 = vld [vmem:[%s649 + $0xc2] sm:$0xff]
        %v1053 = vld [vmem:[%s649 + $0xca] sm:$0xff]
        %v1054 = vld [vmem:[%s649 + $0xda] sm:$0xff]
        %v1055 = vld [vmem:[%s649 + $0xe2] sm:$0xff]
        %v1056 = vld [vmem:[%s649 + $0xf2] sm:$0xff]
        %v1057 = vld [vmem:[%s649 + $0xfa] sm:$0xff]
        %v1058 = vld [vmem:[%s649 + $0x10a] sm:$0xff]
        %v1059 = vld [vmem:[%s649 + $0x112] sm:$0xff]
        %v1060 = vld [vmem:[%s649 + $0x122] sm:$0xff]
        %v1061 = vld [vmem:[%s649 + $0x12a] sm:$0xff]
        %v1062 = vld [vmem:[%s649 + $0x13a] sm:$0xff]
        %v1063 = vld [vmem:[%s649 + $0x142] sm:$0xff]
        %v1064 = vld [vmem:[%s649 + $0x152] sm:$0xff]
        %v1065 = vld [vmem:[%s649 + $0x15a] sm:$0xff]
        %v1066 = vld [vmem:[%s649 + $0x16a] sm:$0xff]
        %v1067 = vld [vmem:[%s649 + $0x172] sm:$0xff]
        %1100 = vrot.lane.b32.xlu0 %v1036, 20
        %v1101 = vpop.permute.xlu0 %1100
        %1102 = vrot.lane.b32.xlu0 %v1037, 20
        %v1103 = vpop.permute.xlu0 %1102
        %1104 = vrot.lane.b32.xlu0 %v1038, 20
        %v1105 = vpop.permute.xlu0 %1104
        %1106 = vrot.lane.b32.xlu0 %v1039, 20
        %v1107 = vpop.permute.xlu0 %1106
        %1108 = vrot.lane.b32.xlu0 %v1040, 20
        %v1109 = vpop.permute.xlu0 %1108
        %1110 = vrot.lane.b32.xlu0 %v1041, 20
        %v1111 = vpop.permute.xlu0 %1110
        %1112 = vrot.lane.b32.xlu0 %v1042, 20
        %v1113 = vpop.permute.xlu0 %1112
        %1114 = vrot.lane.b32.xlu0 %v1043, 20
        %v1115 = vpop.permute.xlu0 %1114
        %1116 = vrot.lane.b32.xlu0 %v1044, 20
        %v1117 = vpop.permute.xlu0 %1116
        %1118 = vrot.lane.b32.xlu0 %v1045, 20
        %v1119 = vpop.permute.xlu0 %1118
        %1120 = vrot.lane.b32.xlu0 %v1046, 20
        %v1121 = vpop.permute.xlu0 %1120
        %1122 = vrot.lane.b32.xlu0 %v1047, 20
        %v1123 = vpop.permute.xlu0 %1122
        %1124 = vrot.lane.b32.xlu0 %v1048, 20
        %v1125 = vpop.permute.xlu0 %1124
        %1126 = vrot.lane.b32.xlu0 %v1049, 20
        %v1127 = vpop.permute.xlu0 %1126
        %1128 = vrot.lane.b32.xlu0 %v1050, 20
        %v1129 = vpop.permute.xlu0 %1128
        %1130 = vrot.lane.b32.xlu0 %v1051, 20
        %v1131 = vpop.permute.xlu0 %1130
        %1132 = vrot.lane.b32.xlu0 %v1052, 20
        %v1133 = vpop.permute.xlu0 %1132
        %1134 = vrot.lane.b32.xlu0 %v1053, 20
        %v1135 = vpop.permute.xlu0 %1134
        %1136 = vrot.lane.b32.xlu0 %v1054, 20
        %v1137 = vpop.permute.xlu0 %1136
        %1138 = vrot.lane.b32.xlu0 %v1055, 20
        %v1139 = vpop.permute.xlu0 %1138
        %1140 = vrot.lane.b32.xlu0 %v1056, 20
        %v1141 = vpop.permute.xlu0 %1140
        %1142 = vrot.lane.b32.xlu0 %v1057, 20
        %v1143 = vpop.permute.xlu0 %1142
        %1144 = vrot.lane.b32.xlu0 %v1058, 20
        %v1145 = vpop.permute.xlu0 %1144
        %1146 = vrot.lane.b32.xlu0 %v1059, 20
        %v1147 = vpop.permute.xlu0 %1146
        %1148 = vrot.lane.b32.xlu0 %v1060, 20
        %v1149 = vpop.permute.xlu0 %1148
        %1150 = vrot.lane.b32.xlu0 %v1061, 20
        %v1151 = vpop.permute.xlu0 %1150
        %1152 = vrot.lane.b32.xlu0 %v1062, 20
        %v1153 = vpop.permute.xlu0 %1152
        %1154 = vrot.lane.b32.xlu0 %v1063, 20
        %v1155 = vpop.permute.xlu0 %1154
        %1156 = vrot.lane.b32.xlu0 %v1064, 20
        %v1157 = vpop.permute.xlu0 %1156
        %1158 = vrot.lane.b32.xlu0 %v1065, 20
        %v1159 = vpop.permute.xlu0 %1158
        %1160 = vrot.lane.b32.xlu0 %v1066, 20
        %v1161 = vpop.permute.xlu0 %1160
        %1162 = vrot.lane.b32.xlu0 %v1067, 20
        %v1163 = vpop.permute.xlu0 %1162
        %vm1196 = vcmask 195744
        %1197 = vst.msk [vmem:[#allocation2] sm:$0xff] %vm1196, %v1101
        %1198 = vst.msk [vmem:[#allocation2 + $0x8] sm:$0xff] %vm1196, %v1103
        %1199 = vst.msk [vmem:[#allocation2 + $0x10] sm:$0xff] %vm1196, %v1105
        %1200 = vst.msk [vmem:[#allocation2 + $0x18] sm:$0xff] %vm1196, %v1107
        %1201 = vst.msk [vmem:[#allocation2 + $0x20] sm:$0xff] %vm1196, %v1109
        %1202 = vst.msk [vmem:[#allocation2 + $0x28] sm:$0xff] %vm1196, %v1111
        %1203 = vst.msk [vmem:[#allocation2 + $0x30] sm:$0xff] %vm1196, %v1113
        %1204 = vst.msk [vmem:[#allocation2 + $0x38] sm:$0xff] %vm1196, %v1115
        %1205 = vst.msk [vmem:[#allocation2 + $0x40] sm:$0xff] %vm1196, %v1117
        %1206 = vst.msk [vmem:[#allocation2 + $0x48] sm:$0xff] %vm1196, %v1119
        %1207 = vst.msk [vmem:[#allocation2 + $0x50] sm:$0xff] %vm1196, %v1121
        %1208 = vst.msk [vmem:[#allocation2 + $0x58] sm:$0xff] %vm1196, %v1123
        %1209 = vst.msk [vmem:[#allocation2 + $0x60] sm:$0xff] %vm1196, %v1125
        %1210 = vst.msk [vmem:[#allocation2 + $0x68] sm:$0xff] %vm1196, %v1127
        %1211 = vst.msk [vmem:[#allocation2 + $0x70] sm:$0xff] %vm1196, %v1129
        %1212 = vst.msk [vmem:[#allocation2 + $0x78] sm:$0xff] %vm1196, %v1131
        %1213 = vst.msk [vmem:[#allocation2 + $0x80] sm:$0xff] %vm1196, %v1133
        %1214 = vst.msk [vmem:[#allocation2 + $0x88] sm:$0xff] %vm1196, %v1135
        %1215 = vst.msk [vmem:[#allocation2 + $0x90] sm:$0xff] %vm1196, %v1137
        %1216 = vst.msk [vmem:[#allocation2 + $0x98] sm:$0xff] %vm1196, %v1139
        %1217 = vst.msk [vmem:[#allocation2 + $0xa0] sm:$0xff] %vm1196, %v1141
        %1218 = vst.msk [vmem:[#allocation2 + $0xa8] sm:$0xff] %vm1196, %v1143
        %1219 = vst.msk [vmem:[#allocation2 + $0xb0] sm:$0xff] %vm1196, %v1145
        %1220 = vst.msk [vmem:[#allocation2 + $0xb8] sm:$0xff] %vm1196, %v1147
        %1221 = vst.msk [vmem:[#allocation2 + $0xc0] sm:$0xff] %vm1196, %v1149
        %1222 = vst.msk [vmem:[#allocation2 + $0xc8] sm:$0xff] %vm1196, %v1151
        %1223 = vst.msk [vmem:[#allocation2 + $0xd0] sm:$0xff] %vm1196, %v1153
        %1224 = vst.msk [vmem:[#allocation2 + $0xd8] sm:$0xff] %vm1196, %v1155
        %1225 = vst.msk [vmem:[#allocation2 + $0xe0] sm:$0xff] %vm1196, %v1157
        %1226 = vst.msk [vmem:[#allocation2 + $0xe8] sm:$0xff] %vm1196, %v1159
        %1227 = vst.msk [vmem:[#allocation2 + $0xf0] sm:$0xff] %vm1196, %v1161
        %1228 = vst.msk [vmem:[#allocation2 + $0xf8] sm:$0xff] %vm1196, %v1163
        %s1229 = scalar_lea.vmem %s197, 48
        %v1230 = vld [vmem:[%s1229] sm:$0xff]
        %v1231 = vld [vmem:[%s1229 + $0x8] sm:$0xff]
        %v1232 = vld [vmem:[%s1229 + $0x18] sm:$0xff]
        %v1233 = vld [vmem:[%s1229 + $0x20] sm:$0xff]
        %v1234 = vld [vmem:[%s1229 + $0x30] sm:$0xff]
        %v1235 = vld [vmem:[%s1229 + $0x38] sm:$0xff]
        %v1236 = vld [vmem:[%s1229 + $0x48] sm:$0xff]
        %v1237 = vld [vmem:[%s1229 + $0x50] sm:$0xff]
        %v1238 = vld [vmem:[%s1229 + $0x60] sm:$0xff]
        %v1239 = vld [vmem:[%s1229 + $0x68] sm:$0xff]
        %v1240 = vld [vmem:[%s1229 + $0x78] sm:$0xff]
        %v1241 = vld [vmem:[%s1229 + $0x80] sm:$0xff]
        %v1242 = vld [vmem:[%s1229 + $0x90] sm:$0xff]
        %v1243 = vld [vmem:[%s1229 + $0x98] sm:$0xff]
        %v1244 = vld [vmem:[%s1229 + $0xa8] sm:$0xff]
        %v1245 = vld [vmem:[%s1229 + $0xb0] sm:$0xff]
        %v1246 = vld [vmem:[%s1229 + $0xc0] sm:$0xff]
        %v1247 = vld [vmem:[%s1229 + $0xc8] sm:$0xff]
        %v1248 = vld [vmem:[%s1229 + $0xd8] sm:$0xff]
        %v1249 = vld [vmem:[%s1229 + $0xe0] sm:$0xff]
        %v1250 = vld [vmem:[%s1229 + $0xf0] sm:$0xff]
        %v1251 = vld [vmem:[%s1229 + $0xf8] sm:$0xff]
        %v1252 = vld [vmem:[%s1229 + $0x108] sm:$0xff]
        %v1253 = vld [vmem:[%s1229 + $0x110] sm:$0xff]
        %v1254 = vld [vmem:[%s1229 + $0x120] sm:$0xff]
        %v1255 = vld [vmem:[%s1229 + $0x128] sm:$0xff]
        %v1256 = vld [vmem:[%s1229 + $0x138] sm:$0xff]
        %v1257 = vld [vmem:[%s1229 + $0x140] sm:$0xff]
        %v1258 = vld [vmem:[%s1229 + $0x150] sm:$0xff]
        %v1259 = vld [vmem:[%s1229 + $0x158] sm:$0xff]
        %v1260 = vld [vmem:[%s1229 + $0x168] sm:$0xff]
        %v1261 = vld [vmem:[%s1229 + $0x170] sm:$0xff]
        %1294 = vrot.lane.b32.xlu0 %v1230, 24
        %v1295 = vpop.permute.xlu0 %1294
        %1296 = vrot.lane.b32.xlu0 %v1231, 24
        %v1297 = vpop.permute.xlu0 %1296
        %1298 = vrot.lane.b32.xlu0 %v1232, 24
        %v1299 = vpop.permute.xlu0 %1298
        %1300 = vrot.lane.b32.xlu0 %v1233, 24
        %v1301 = vpop.permute.xlu0 %1300
        %1302 = vrot.lane.b32.xlu0 %v1234, 24
        %v1303 = vpop.permute.xlu0 %1302
        %1304 = vrot.lane.b32.xlu0 %v1235, 24
        %v1305 = vpop.permute.xlu0 %1304
        %1306 = vrot.lane.b32.xlu0 %v1236, 24
        %v1307 = vpop.permute.xlu0 %1306
        %1308 = vrot.lane.b32.xlu0 %v1237, 24
        %v1309 = vpop.permute.xlu0 %1308
        %1310 = vrot.lane.b32.xlu0 %v1238, 24
        %v1311 = vpop.permute.xlu0 %1310
        %1312 = vrot.lane.b32.xlu0 %v1239, 24
        %v1313 = vpop.permute.xlu0 %1312
        %1314 = vrot.lane.b32.xlu0 %v1240, 24
        %v1315 = vpop.permute.xlu0 %1314
        %1316 = vrot.lane.b32.xlu0 %v1241, 24
        %v1317 = vpop.permute.xlu0 %1316
        %1318 = vrot.lane.b32.xlu0 %v1242, 24
        %v1319 = vpop.permute.xlu0 %1318
        %1320 = vrot.lane.b32.xlu0 %v1243, 24
        %v1321 = vpop.permute.xlu0 %1320
        %1322 = vrot.lane.b32.xlu0 %v1244, 24
        %v1323 = vpop.permute.xlu0 %1322
        %1324 = vrot.lane.b32.xlu0 %v1245, 24
        %v1325 = vpop.permute.xlu0 %1324
        %1326 = vrot.lane.b32.xlu0 %v1246, 24
        %v1327 = vpop.permute.xlu0 %1326
        %1328 = vrot.lane.b32.xlu0 %v1247, 24
        %v1329 = vpop.permute.xlu0 %1328
        %1330 = vrot.lane.b32.xlu0 %v1248, 24
        %v1331 = vpop.permute.xlu0 %1330
        %1332 = vrot.lane.b32.xlu0 %v1249, 24
        %v1333 = vpop.permute.xlu0 %1332
        %1334 = vrot.lane.b32.xlu0 %v1250, 24
        %v1335 = vpop.permute.xlu0 %1334
        %1336 = vrot.lane.b32.xlu0 %v1251, 24
        %v1337 = vpop.permute.xlu0 %1336
        %1338 = vrot.lane.b32.xlu0 %v1252, 24
        %v1339 = vpop.permute.xlu0 %1338
        %1340 = vrot.lane.b32.xlu0 %v1253, 24
        %v1341 = vpop.permute.xlu0 %1340
        %1342 = vrot.lane.b32.xlu0 %v1254, 24
        %v1343 = vpop.permute.xlu0 %1342
        %1344 = vrot.lane.b32.xlu0 %v1255, 24
        %v1345 = vpop.permute.xlu0 %1344
        %1346 = vrot.lane.b32.xlu0 %v1256, 24
        %v1347 = vpop.permute.xlu0 %1346
        %1348 = vrot.lane.b32.xlu0 %v1257, 24
        %v1349 = vpop.permute.xlu0 %1348
        %1350 = vrot.lane.b32.xlu0 %v1258, 24
        %v1351 = vpop.permute.xlu0 %1350
        %1352 = vrot.lane.b32.xlu0 %v1259, 24
        %v1353 = vpop.permute.xlu0 %1352
        %1354 = vrot.lane.b32.xlu0 %v1260, 24
        %v1355 = vpop.permute.xlu0 %1354
        %1356 = vrot.lane.b32.xlu0 %v1261, 24
        %v1357 = vpop.permute.xlu0 %1356
        %vm1390 = vcmask 228544
        %1391 = vst.msk [vmem:[#allocation2] sm:$0xff] %vm1390, %v1295
        %1392 = vst.msk [vmem:[#allocation2 + $0x8] sm:$0xff] %vm1390, %v1297
        %1393 = vst.msk [vmem:[#allocation2 + $0x10] sm:$0xff] %vm1390, %v1299
        %1394 = vst.msk [vmem:[#allocation2 + $0x18] sm:$0xff] %vm1390, %v1301
        %1395 = vst.msk [vmem:[#allocation2 + $0x20] sm:$0xff] %vm1390, %v1303
        %1396 = vst.msk [vmem:[#allocation2 + $0x28] sm:$0xff] %vm1390, %v1305
        %1397 = vst.msk [vmem:[#allocation2 + $0x30] sm:$0xff] %vm1390, %v1307
        %1398 = vst.msk [vmem:[#allocation2 + $0x38] sm:$0xff] %vm1390, %v1309
        %1399 = vst.msk [vmem:[#allocation2 + $0x40] sm:$0xff] %vm1390, %v1311
        %1400 = vst.msk [vmem:[#allocation2 + $0x48] sm:$0xff] %vm1390, %v1313
        %1401 = vst.msk [vmem:[#allocation2 + $0x50] sm:$0xff] %vm1390, %v1315
        %1402 = vst.msk [vmem:[#allocation2 + $0x58] sm:$0xff] %vm1390, %v1317
        %1403 = vst.msk [vmem:[#allocation2 + $0x60] sm:$0xff] %vm1390, %v1319
        %1404 = vst.msk [vmem:[#allocation2 + $0x68] sm:$0xff] %vm1390, %v1321
        %1405 = vst.msk [vmem:[#allocation2 + $0x70] sm:$0xff] %vm1390, %v1323
        %1406 = vst.msk [vmem:[#allocation2 + $0x78] sm:$0xff] %vm1390, %v1325
        %1407 = vst.msk [vmem:[#allocation2 + $0x80] sm:$0xff] %vm1390, %v1327
        %1408 = vst.msk [vmem:[#allocation2 + $0x88] sm:$0xff] %vm1390, %v1329
        %1409 = vst.msk [vmem:[#allocation2 + $0x90] sm:$0xff] %vm1390, %v1331
        %1410 = vst.msk [vmem:[#allocation2 + $0x98] sm:$0xff] %vm1390, %v1333
        %1411 = vst.msk [vmem:[#allocation2 + $0xa0] sm:$0xff] %vm1390, %v1335
        %1412 = vst.msk [vmem:[#allocation2 + $0xa8] sm:$0xff] %vm1390, %v1337
        %1413 = vst.msk [vmem:[#allocation2 + $0xb0] sm:$0xff] %vm1390, %v1339
        %1414 = vst.msk [vmem:[#allocation2 + $0xb8] sm:$0xff] %vm1390, %v1341
        %1415 = vst.msk [vmem:[#allocation2 + $0xc0] sm:$0xff] %vm1390, %v1343
        %1416 = vst.msk [vmem:[#allocation2 + $0xc8] sm:$0xff] %vm1390, %v1345
        %1417 = vst.msk [vmem:[#allocation2 + $0xd0] sm:$0xff] %vm1390, %v1347
        %1418 = vst.msk [vmem:[#allocation2 + $0xd8] sm:$0xff] %vm1390, %v1349
        %1419 = vst.msk [vmem:[#allocation2 + $0xe0] sm:$0xff] %vm1390, %v1351
        %1420 = vst.msk [vmem:[#allocation2 + $0xe8] sm:$0xff] %vm1390, %v1353
        %1421 = vst.msk [vmem:[#allocation2 + $0xf0] sm:$0xff] %vm1390, %v1355
        %1422 = vst.msk [vmem:[#allocation2 + $0xf8] sm:$0xff] %vm1390, %v1357
        %v1423 = vld [vmem:[%s1229 + $0x1] sm:$0xff]
        %v1424 = vld [vmem:[%s1229 + $0x9] sm:$0xff]
        %v1425 = vld [vmem:[%s1229 + $0x19] sm:$0xff]
        %v1426 = vld [vmem:[%s1229 + $0x21] sm:$0xff]
        %v1427 = vld [vmem:[%s1229 + $0x31] sm:$0xff]
        %v1428 = vld [vmem:[%s1229 + $0x39] sm:$0xff]
        %v1429 = vld [vmem:[%s1229 + $0x49] sm:$0xff]
        %v1430 = vld [vmem:[%s1229 + $0x51] sm:$0xff]
        %v1431 = vld [vmem:[%s1229 + $0x61] sm:$0xff]
        %v1432 = vld [vmem:[%s1229 + $0x69] sm:$0xff]
        %v1433 = vld [vmem:[%s1229 + $0x79] sm:$0xff]
        %v1434 = vld [vmem:[%s1229 + $0x81] sm:$0xff]
        %v1435 = vld [vmem:[%s1229 + $0x91] sm:$0xff]
        %v1436 = vld [vmem:[%s1229 + $0x99] sm:$0xff]
        %v1437 = vld [vmem:[%s1229 + $0xa9] sm:$0xff]
        %v1438 = vld [vmem:[%s1229 + $0xb1] sm:$0xff]
        %v1439 = vld [vmem:[%s1229 + $0xc1] sm:$0xff]
        %v1440 = vld [vmem:[%s1229 + $0xc9] sm:$0xff]
        %v1441 = vld [vmem:[%s1229 + $0xd9] sm:$0xff]
        %v1442 = vld [vmem:[%s1229 + $0xe1] sm:$0xff]
        %v1443 = vld [vmem:[%s1229 + $0xf1] sm:$0xff]
        %v1444 = vld [vmem:[%s1229 + $0xf9] sm:$0xff]
        %v1445 = vld [vmem:[%s1229 + $0x109] sm:$0xff]
        %v1446 = vld [vmem:[%s1229 + $0x111] sm:$0xff]
        %v1447 = vld [vmem:[%s1229 + $0x121] sm:$0xff]
        %v1448 = vld [vmem:[%s1229 + $0x129] sm:$0xff]
        %v1449 = vld [vmem:[%s1229 + $0x139] sm:$0xff]
        %v1450 = vld [vmem:[%s1229 + $0x141] sm:$0xff]
        %v1451 = vld [vmem:[%s1229 + $0x151] sm:$0xff]
        %v1452 = vld [vmem:[%s1229 + $0x159] sm:$0xff]
        %v1453 = vld [vmem:[%s1229 + $0x169] sm:$0xff]
        %v1454 = vld [vmem:[%s1229 + $0x171] sm:$0xff]
        %1487 = vrot.lane.b32.xlu0 %v1423, 28
        %v1488 = vpop.permute.xlu0 %1487
        %1489 = vrot.lane.b32.xlu0 %v1424, 28
        %v1490 = vpop.permute.xlu0 %1489
        %1491 = vrot.lane.b32.xlu0 %v1425, 28
        %v1492 = vpop.permute.xlu0 %1491
        %1493 = vrot.lane.b32.xlu0 %v1426, 28
        %v1494 = vpop.permute.xlu0 %1493
        %1495 = vrot.lane.b32.xlu0 %v1427, 28
        %v1496 = vpop.permute.xlu0 %1495
        %1497 = vrot.lane.b32.xlu0 %v1428, 28
        %v1498 = vpop.permute.xlu0 %1497
        %1499 = vrot.lane.b32.xlu0 %v1429, 28
        %v1500 = vpop.permute.xlu0 %1499
        %1501 = vrot.lane.b32.xlu0 %v1430, 28
        %v1502 = vpop.permute.xlu0 %1501
        %1503 = vrot.lane.b32.xlu0 %v1431, 28
        %v1504 = vpop.permute.xlu0 %1503
        %1505 = vrot.lane.b32.xlu0 %v1432, 28
        %v1506 = vpop.permute.xlu0 %1505
        %1507 = vrot.lane.b32.xlu0 %v1433, 28
        %v1508 = vpop.permute.xlu0 %1507
        %1509 = vrot.lane.b32.xlu0 %v1434, 28
        %v1510 = vpop.permute.xlu0 %1509
        %1511 = vrot.lane.b32.xlu0 %v1435, 28
        %v1512 = vpop.permute.xlu0 %1511
        %1513 = vrot.lane.b32.xlu0 %v1436, 28
        %v1514 = vpop.permute.xlu0 %1513
        %1515 = vrot.lane.b32.xlu0 %v1437, 28
        %v1516 = vpop.permute.xlu0 %1515
        %1517 = vrot.lane.b32.xlu0 %v1438, 28
        %v1518 = vpop.permute.xlu0 %1517
        %1519 = vrot.lane.b32.xlu0 %v1439, 28
        %v1520 = vpop.permute.xlu0 %1519
        %1521 = vrot.lane.b32.xlu0 %v1440, 28
        %v1522 = vpop.permute.xlu0 %1521
        %1523 = vrot.lane.b32.xlu0 %v1441, 28
        %v1524 = vpop.permute.xlu0 %1523
        %1525 = vrot.lane.b32.xlu0 %v1442, 28
        %v1526 = vpop.permute.xlu0 %1525
        %1527 = vrot.lane.b32.xlu0 %v1443, 28
        %v1528 = vpop.permute.xlu0 %1527
        %1529 = vrot.lane.b32.xlu0 %v1444, 28
        %v1530 = vpop.permute.xlu0 %1529
        %1531 = vrot.lane.b32.xlu0 %v1445, 28
        %v1532 = vpop.permute.xlu0 %1531
        %1533 = vrot.lane.b32.xlu0 %v1446, 28
        %v1534 = vpop.permute.xlu0 %1533
        %1535 = vrot.lane.b32.xlu0 %v1447, 28
        %v1536 = vpop.permute.xlu0 %1535
        %1537 = vrot.lane.b32.xlu0 %v1448, 28
        %v1538 = vpop.permute.xlu0 %1537
        %1539 = vrot.lane.b32.xlu0 %v1449, 28
        %v1540 = vpop.permute.xlu0 %1539
        %1541 = vrot.lane.b32.xlu0 %v1450, 28
        %v1542 = vpop.permute.xlu0 %1541
        %1543 = vrot.lane.b32.xlu0 %v1451, 28
        %v1544 = vpop.permute.xlu0 %1543
        %1545 = vrot.lane.b32.xlu0 %v1452, 28
        %v1546 = vpop.permute.xlu0 %1545
        %1547 = vrot.lane.b32.xlu0 %v1453, 28
        %v1548 = vpop.permute.xlu0 %1547
        %1549 = vrot.lane.b32.xlu0 %v1454, 28
        %v1550 = vpop.permute.xlu0 %1549
        %vm1583 = vcmask 261344
        %1584 = vst.msk [vmem:[#allocation2] sm:$0xff] %vm1583, %v1488
        %1585 = vst.msk [vmem:[#allocation2 + $0x8] sm:$0xff] %vm1583, %v1490
        %1586 = vst.msk [vmem:[#allocation2 + $0x10] sm:$0xff] %vm1583, %v1492
        %1587 = vst.msk [vmem:[#allocation2 + $0x18] sm:$0xff] %vm1583, %v1494
        %1588 = vst.msk [vmem:[#allocation2 + $0x20] sm:$0xff] %vm1583, %v1496
        %1589 = vst.msk [vmem:[#allocation2 + $0x28] sm:$0xff] %vm1583, %v1498
        %1590 = vst.msk [vmem:[#allocation2 + $0x30] sm:$0xff] %vm1583, %v1500
        %1591 = vst.msk [vmem:[#allocation2 + $0x38] sm:$0xff] %vm1583, %v1502
        %1592 = vst.msk [vmem:[#allocation2 + $0x40] sm:$0xff] %vm1583, %v1504
        %1593 = vst.msk [vmem:[#allocation2 + $0x48] sm:$0xff] %vm1583, %v1506
        %1594 = vst.msk [vmem:[#allocation2 + $0x50] sm:$0xff] %vm1583, %v1508
        %1595 = vst.msk [vmem:[#allocation2 + $0x58] sm:$0xff] %vm1583, %v1510
        %1596 = vst.msk [vmem:[#allocation2 + $0x60] sm:$0xff] %vm1583, %v1512
        %1597 = vst.msk [vmem:[#allocation2 + $0x68] sm:$0xff] %vm1583, %v1514
        %1598 = vst.msk [vmem:[#allocation2 + $0x70] sm:$0xff] %vm1583, %v1516
        %1599 = vst.msk [vmem:[#allocation2 + $0x78] sm:$0xff] %vm1583, %v1518
        %1600 = vst.msk [vmem:[#allocation2 + $0x80] sm:$0xff] %vm1583, %v1520
        %1601 = vst.msk [vmem:[#allocation2 + $0x88] sm:$0xff] %vm1583, %v1522
        %1602 = vst.msk [vmem:[#allocation2 + $0x90] sm:$0xff] %vm1583, %v1524
        %1603 = vst.msk [vmem:[#allocation2 + $0x98] sm:$0xff] %vm1583, %v1526
        %1604 = vst.msk [vmem:[#allocation2 + $0xa0] sm:$0xff] %vm1583, %v1528
        %1605 = vst.msk [vmem:[#allocation2 + $0xa8] sm:$0xff] %vm1583, %v1530
        %1606 = vst.msk [vmem:[#allocation2 + $0xb0] sm:$0xff] %vm1583, %v1532
        %1607 = vst.msk [vmem:[#allocation2 + $0xb8] sm:$0xff] %vm1583, %v1534
        %1608 = vst.msk [vmem:[#allocation2 + $0xc0] sm:$0xff] %vm1583, %v1536
        %1609 = vst.msk [vmem:[#allocation2 + $0xc8] sm:$0xff] %vm1583, %v1538
        %1610 = vst.msk [vmem:[#allocation2 + $0xd0] sm:$0xff] %vm1583, %v1540
        %1611 = vst.msk [vmem:[#allocation2 + $0xd8] sm:$0xff] %vm1583, %v1542
        %1612 = vst.msk [vmem:[#allocation2 + $0xe0] sm:$0xff] %vm1583, %v1544
        %1613 = vst.msk [vmem:[#allocation2 + $0xe8] sm:$0xff] %vm1583, %v1546
        %1614 = vst.msk [vmem:[#allocation2 + $0xf0] sm:$0xff] %vm1583, %v1548
        %1615 = vst.msk [vmem:[#allocation2 + $0xf8] sm:$0xff] %vm1583, %v1550
        %v1616 = vld [vmem:[%s1229 + $0x2] sm:$0xff]
        %v1617 = vld [vmem:[%s1229 + $0xa] sm:$0xff]
        %v1618 = vld [vmem:[%s1229 + $0x1a] sm:$0xff]
        %v1619 = vld [vmem:[%s1229 + $0x22] sm:$0xff]
        %v1620 = vld [vmem:[%s1229 + $0x32] sm:$0xff]
        %v1621 = vld [vmem:[%s1229 + $0x3a] sm:$0xff]
        %v1622 = vld [vmem:[%s1229 + $0x4a] sm:$0xff]
        %v1623 = vld [vmem:[%s1229 + $0x52] sm:$0xff]
        %v1624 = vld [vmem:[%s1229 + $0x62] sm:$0xff]
        %v1625 = vld [vmem:[%s1229 + $0x6a] sm:$0xff]
        %v1626 = vld [vmem:[%s1229 + $0x7a] sm:$0xff]
        %v1627 = vld [vmem:[%s1229 + $0x82] sm:$0xff]
        %v1628 = vld [vmem:[%s1229 + $0x92] sm:$0xff]
        %v1629 = vld [vmem:[%s1229 + $0x9a] sm:$0xff]
        %v1630 = vld [vmem:[%s1229 + $0xaa] sm:$0xff]
        %v1631 = vld [vmem:[%s1229 + $0xb2] sm:$0xff]
        %v1632 = vld [vmem:[%s1229 + $0xc2] sm:$0xff]
        %v1633 = vld [vmem:[%s1229 + $0xca] sm:$0xff]
        %v1634 = vld [vmem:[%s1229 + $0xda] sm:$0xff]
        %v1635 = vld [vmem:[%s1229 + $0xe2] sm:$0xff]
        %v1636 = vld [vmem:[%s1229 + $0xf2] sm:$0xff]
        %v1637 = vld [vmem:[%s1229 + $0xfa] sm:$0xff]
        %v1638 = vld [vmem:[%s1229 + $0x10a] sm:$0xff]
        %v1639 = vld [vmem:[%s1229 + $0x112] sm:$0xff]
        %v1640 = vld [vmem:[%s1229 + $0x122] sm:$0xff]
        %v1641 = vld [vmem:[%s1229 + $0x12a] sm:$0xff]
        %v1642 = vld [vmem:[%s1229 + $0x13a] sm:$0xff]
        %v1643 = vld [vmem:[%s1229 + $0x142] sm:$0xff]
        %v1644 = vld [vmem:[%s1229 + $0x152] sm:$0xff]
        %v1645 = vld [vmem:[%s1229 + $0x15a] sm:$0xff]
        %v1646 = vld [vmem:[%s1229 + $0x16a] sm:$0xff]
        %v1647 = vld [vmem:[%s1229 + $0x172] sm:$0xff]
        %1680 = vrot.lane.b32.xlu0 %v1616, 32
        %v1681 = vpop.permute.xlu0 %1680
        %1682 = vrot.lane.b32.xlu0 %v1617, 32
        %v1683 = vpop.permute.xlu0 %1682
        %1684 = vrot.lane.b32.xlu0 %v1618, 32
        %v1685 = vpop.permute.xlu0 %1684
        %1686 = vrot.lane.b32.xlu0 %v1619, 32
        %v1687 = vpop.permute.xlu0 %1686
        %1688 = vrot.lane.b32.xlu0 %v1620, 32
        %v1689 = vpop.permute.xlu0 %1688
        %1690 = vrot.lane.b32.xlu0 %v1621, 32
        %v1691 = vpop.permute.xlu0 %1690
        %1692 = vrot.lane.b32.xlu0 %v1622, 32
        %v1693 = vpop.permute.xlu0 %1692
        %1694 = vrot.lane.b32.xlu0 %v1623, 32
        %v1695 = vpop.permute.xlu0 %1694
        %1696 = vrot.lane.b32.xlu0 %v1624, 32
        %v1697 = vpop.permute.xlu0 %1696
        %1698 = vrot.lane.b32.xlu0 %v1625, 32
        %v1699 = vpop.permute.xlu0 %1698
        %1700 = vrot.lane.b32.xlu0 %v1626, 32
        %v1701 = vpop.permute.xlu0 %1700
        %1702 = vrot.lane.b32.xlu0 %v1627, 32
        %v1703 = vpop.permute.xlu0 %1702
        %1704 = vrot.lane.b32.xlu0 %v1628, 32
        %v1705 = vpop.permute.xlu0 %1704
        %1706 = vrot.lane.b32.xlu0 %v1629, 32
        %v1707 = vpop.permute.xlu0 %1706
        %1708 = vrot.lane.b32.xlu0 %v1630, 32
        %v1709 = vpop.permute.xlu0 %1708
        %1710 = vrot.lane.b32.xlu0 %v1631, 32
        %v1711 = vpop.permute.xlu0 %1710
        %1712 = vrot.lane.b32.xlu0 %v1632, 32
        %v1713 = vpop.permute.xlu0 %1712
        %1714 = vrot.lane.b32.xlu0 %v1633, 32
        %v1715 = vpop.permute.xlu0 %1714
        %1716 = vrot.lane.b32.xlu0 %v1634, 32
        %v1717 = vpop.permute.xlu0 %1716
        %1718 = vrot.lane.b32.xlu0 %v1635, 32
        %v1719 = vpop.permute.xlu0 %1718
        %1720 = vrot.lane.b32.xlu0 %v1636, 32
        %v1721 = vpop.permute.xlu0 %1720
        %1722 = vrot.lane.b32.xlu0 %v1637, 32
        %v1723 = vpop.permute.xlu0 %1722
        %1724 = vrot.lane.b32.xlu0 %v1638, 32
        %v1725 = vpop.permute.xlu0 %1724
        %1726 = vrot.lane.b32.xlu0 %v1639, 32
        %v1727 = vpop.permute.xlu0 %1726
        %1728 = vrot.lane.b32.xlu0 %v1640, 32
        %v1729 = vpop.permute.xlu0 %1728
        %1730 = vrot.lane.b32.xlu0 %v1641, 32
        %v1731 = vpop.permute.xlu0 %1730
        %1732 = vrot.lane.b32.xlu0 %v1642, 32
        %v1733 = vpop.permute.xlu0 %1732
        %1734 = vrot.lane.b32.xlu0 %v1643, 32
        %v1735 = vpop.permute.xlu0 %1734
        %1736 = vrot.lane.b32.xlu0 %v1644, 32
        %v1737 = vpop.permute.xlu0 %1736
        %1738 = vrot.lane.b32.xlu0 %v1645, 32
        %v1739 = vpop.permute.xlu0 %1738
        %1740 = vrot.lane.b32.xlu0 %v1646, 32
        %v1741 = vpop.permute.xlu0 %1740
        %1742 = vrot.lane.b32.xlu0 %v1647, 32
        %v1743 = vpop.permute.xlu0 %1742
        %vm1776 = vcmask 294144
        %1777 = vst.msk [vmem:[#allocation2] sm:$0xff] %vm1776, %v1681
        %1778 = vst.msk [vmem:[#allocation2 + $0x8] sm:$0xff] %vm1776, %v1683
        %1779 = vst.msk [vmem:[#allocation2 + $0x10] sm:$0xff] %vm1776, %v1685
        %1780 = vst.msk [vmem:[#allocation2 + $0x18] sm:$0xff] %vm1776, %v1687
        %1781 = vst.msk [vmem:[#allocation2 + $0x20] sm:$0xff] %vm1776, %v1689
        %1782 = vst.msk [vmem:[#allocation2 + $0x28] sm:$0xff] %vm1776, %v1691
        %1783 = vst.msk [vmem:[#allocation2 + $0x30] sm:$0xff] %vm1776, %v1693
        %1784 = vst.msk [vmem:[#allocation2 + $0x38] sm:$0xff] %vm1776, %v1695
        %1785 = vst.msk [vmem:[#allocation2 + $0x40] sm:$0xff] %vm1776, %v1697
        %1786 = vst.msk [vmem:[#allocation2 + $0x48] sm:$0xff] %vm1776, %v1699
        %1787 = vst.msk [vmem:[#allocation2 + $0x50] sm:$0xff] %vm1776, %v1701
        %1788 = vst.msk [vmem:[#allocation2 + $0x58] sm:$0xff] %vm1776, %v1703
        %1789 = vst.msk [vmem:[#allocation2 + $0x60] sm:$0xff] %vm1776, %v1705
        %1790 = vst.msk [vmem:[#allocation2 + $0x68] sm:$0xff] %vm1776, %v1707
        %1791 = vst.msk [vmem:[#allocation2 + $0x70] sm:$0xff] %vm1776, %v1709
        %1792 = vst.msk [vmem:[#allocation2 + $0x78] sm:$0xff] %vm1776, %v1711
        %1793 = vst.msk [vmem:[#allocation2 + $0x80] sm:$0xff] %vm1776, %v1713
        %1794 = vst.msk [vmem:[#allocation2 + $0x88] sm:$0xff] %vm1776, %v1715
        %1795 = vst.msk [vmem:[#allocation2 + $0x90] sm:$0xff] %vm1776, %v1717
        %1796 = vst.msk [vmem:[#allocation2 + $0x98] sm:$0xff] %vm1776, %v1719
        %1797 = vst.msk [vmem:[#allocation2 + $0xa0] sm:$0xff] %vm1776, %v1721
        %1798 = vst.msk [vmem:[#allocation2 + $0xa8] sm:$0xff] %vm1776, %v1723
        %1799 = vst.msk [vmem:[#allocation2 + $0xb0] sm:$0xff] %vm1776, %v1725
        %1800 = vst.msk [vmem:[#allocation2 + $0xb8] sm:$0xff] %vm1776, %v1727
        %1801 = vst.msk [vmem:[#allocation2 + $0xc0] sm:$0xff] %vm1776, %v1729
        %1802 = vst.msk [vmem:[#allocation2 + $0xc8] sm:$0xff] %vm1776, %v1731
        %1803 = vst.msk [vmem:[#allocation2 + $0xd0] sm:$0xff] %vm1776, %v1733
        %1804 = vst.msk [vmem:[#allocation2 + $0xd8] sm:$0xff] %vm1776, %v1735
        %1805 = vst.msk [vmem:[#allocation2 + $0xe0] sm:$0xff] %vm1776, %v1737
        %1806 = vst.msk [vmem:[#allocation2 + $0xe8] sm:$0xff] %vm1776, %v1739
        %1807 = vst.msk [vmem:[#allocation2 + $0xf0] sm:$0xff] %vm1776, %v1741
        %1808 = vst.msk [vmem:[#allocation2 + $0xf8] sm:$0xff] %vm1776, %v1743
        %v1809 = vld [vmem:[#allocation2] sm:$0xff]
        %v1810 = vld [vmem:[#allocation2 + $0x8] sm:$0xff]
        %v1811 = vld [vmem:[#allocation2 + $0x10] sm:$0xff]
        %v1812 = vld [vmem:[#allocation2 + $0x18] sm:$0xff]
        %v1813 = vld [vmem:[#allocation2 + $0x20] sm:$0xff]
        %v1814 = vld [vmem:[#allocation2 + $0x28] sm:$0xff]
        %v1815 = vld [vmem:[#allocation2 + $0x30] sm:$0xff]
        %v1816 = vld [vmem:[#allocation2 + $0x38] sm:$0xff]
        %v1817 = vld [vmem:[#allocation2 + $0x40] sm:$0xff]
        %v1818 = vld [vmem:[#allocation2 + $0x48] sm:$0xff]
        %v1819 = vld [vmem:[#allocation2 + $0x50] sm:$0xff]
        %v1820 = vld [vmem:[#allocation2 + $0x58] sm:$0xff]
        %v1821 = vld [vmem:[#allocation2 + $0x60] sm:$0xff]
        %v1822 = vld [vmem:[#allocation2 + $0x68] sm:$0xff]
        %v1823 = vld [vmem:[#allocation2 + $0x70] sm:$0xff]
        %v1824 = vld [vmem:[#allocation2 + $0x78] sm:$0xff]
        %v1825 = vld [vmem:[#allocation2 + $0x80] sm:$0xff]
        %v1826 = vld [vmem:[#allocation2 + $0x88] sm:$0xff]
        %v1827 = vld [vmem:[#allocation2 + $0x90] sm:$0xff]
        %v1828 = vld [vmem:[#allocation2 + $0x98] sm:$0xff]
        %v1829 = vld [vmem:[#allocation2 + $0xa0] sm:$0xff]
        %v1830 = vld [vmem:[#allocation2 + $0xa8] sm:$0xff]
        %v1831 = vld [vmem:[#allocation2 + $0xb0] sm:$0xff]
        %v1832 = vld [vmem:[#allocation2 + $0xb8] sm:$0xff]
        %v1833 = vld [vmem:[#allocation2 + $0xc0] sm:$0xff]
        %v1834 = vld [vmem:[#allocation2 + $0xc8] sm:$0xff]
        %v1835 = vld [vmem:[#allocation2 + $0xd0] sm:$0xff]
        %v1836 = vld [vmem:[#allocation2 + $0xd8] sm:$0xff]
        %v1837 = vld [vmem:[#allocation2 + $0xe0] sm:$0xff]
        %v1838 = vld [vmem:[#allocation2 + $0xe8] sm:$0xff]
        %v1839 = vld [vmem:[#allocation2 + $0xf0] sm:$0xff]
        %v1840 = vld [vmem:[#allocation2 + $0xf8] sm:$0xff]
        %v1841 = vld [vmem:[%s1] sm:$0xff]
        %v1842 = vld [vmem:[%s1 + $0x8] sm:$0xff]
        %v1843 = vld [vmem:[%s1 + $0x10] sm:$0xff]
        %v1844 = vld [vmem:[%s1 + $0x18] sm:$0xff]
        %v1845 = vld [vmem:[%s1 + $0x20] sm:$0xf]
        %vm1846 = vcmask 293888
        %v1848 = vsel %vm1846, %v1809, 0
        %v1851 = vsel %vm1846, %v1810, 0
        %v1854 = vsel %vm1846, %v1811, 0
        %v1857 = vsel %vm1846, %v1812, 0
        %v1860 = vsel %vm1846, %v1813, 0
        %v1863 = vsel %vm1846, %v1814, 0
        %v1866 = vsel %vm1846, %v1815, 0
        %v1869 = vsel %vm1846, %v1816, 0
        %v1872 = vsel %vm1846, %v1817, 0
        %v1875 = vsel %vm1846, %v1818, 0
        %v1878 = vsel %vm1846, %v1819, 0
        %v1881 = vsel %vm1846, %v1820, 0
        %v1884 = vsel %vm1846, %v1821, 0
        %v1887 = vsel %vm1846, %v1822, 0
        %v1890 = vsel %vm1846, %v1823, 0
        %v1893 = vsel %vm1846, %v1824, 0
        %v1896 = vsel %vm1846, %v1825, 0
        %v1899 = vsel %vm1846, %v1826, 0
        %v1902 = vsel %vm1846, %v1827, 0
        %v1905 = vsel %vm1846, %v1828, 0
        %v1908 = vsel %vm1846, %v1829, 0
        %v1911 = vsel %vm1846, %v1830, 0
        %v1914 = vsel %vm1846, %v1831, 0
        %v1917 = vsel %vm1846, %v1832, 0
        %v1920 = vsel %vm1846, %v1833, 0
        %v1923 = vsel %vm1846, %v1834, 0
        %v1926 = vsel %vm1846, %v1835, 0
        %v1929 = vsel %vm1846, %v1836, 0
        %v1932 = vsel %vm1846, %v1837, 0
        %v1935 = vsel %vm1846, %v1838, 0
        %v1938 = vsel %vm1846, %v1839, 0
        %v1941 = vsel %vm1846, %v1840, 0
        %vm1943 = vcmask 1043456
        %v1945 = vsel %vm1943, %v1845, 0
        %1947 = vmatprep.subr.mxu0 0.0
        %1948 = vmatpush1.msra.mxu0 %v1841
        %1949 = vmatprep.subr.mxu0 0.0
        %1950 = vmatpush1.msra.mxu0 %v1842
        %1951 = vmatprep.subr.mxu0 0.0
        %1952 = vmatpush1.msra.mxu0 %v1843
        %1953 = vmatprep.subr.mxu0 0.0
        %1954 = vmatpush1.msra.mxu0 %v1844
        %1955 = vmatprep.subr.mxu0 0.0
        %1956 = vmatpush1.msra.mxu0 %v1945
        %1957 = vmatprep.subr.mxu0 0.0
        %1958 = vmatpush1.msra.mxu0 0.0
        %1959 = vmatprep.subr.mxu0 0.0
        %1960 = vmatpush1.msra.mxu0 0.0
        %1961 = vmatprep.subr.mxu0 0.0
        %1962 = vmatpush1.msra.mxu0 0.0
        %1963 = vmatprep.subr.mxu0 0.0
        %1964 = vmatpush1.msra.mxu0 0.0
        %1965 = vmatprep.subr.mxu0 0.0
        %1966 = vmatpush1.msra.mxu0 0.0
        %1967 = vmatprep.subr.mxu0 0.0
        %1968 = vmatpush1.msra.mxu0 0.0
        %1969 = vmatprep.subr.mxu0 0.0
        %1970 = vmatpush1.msra.mxu0 0.0
        %1971 = vmatprep.subr.mxu0 0.0
        %1972 = vmatpush1.msra.mxu0 0.0
        %1973 = vmatprep.subr.mxu0 0.0
        %1974 = vmatpush1.msra.mxu0 0.0
        %1975 = vmatprep.subr.mxu0 0.0
        %1976 = vmatpush1.msra.mxu0 0.0
        %1977 = vmatprep.subr.mxu0 0.0
        %1978 = vmatpush1.msra.mxu0 0.0
        %1979 = vmatprep.subr.mxu0 0.0
        %1980 = vmatpush1.msra.mxu0 0.0
        %1981 = vmatprep.subr.mxu0 0.0
        %1982 = vmatpush1.msra.mxu0 0.0
        %1983 = vmatprep.subr.mxu0 0.0
        %1984 = vmatpush1.msra.mxu0 0.0
        %1985 = vmatprep.subr.mxu0 0.0
        %1986 = vmatpush1.msra.mxu0 0.0
        %1987 = vmatprep.subr.mxu0 0.0
        %1988 = vmatpush1.msra.mxu0 0.0
        %1989 = vmatprep.subr.mxu0 0.0
        %1990 = vmatpush1.msra.mxu0 0.0
        %1991 = vmatprep.subr.mxu0 0.0
        %1992 = vmatpush1.msra.mxu0 0.0
        %1993 = vmatprep.subr.mxu0 0.0
        %1994 = vmatpush1.msra.mxu0 0.0
        %1995 = vmatprep.subr.mxu0 0.0
        %1996 = vmatpush1.msra.mxu0 0.0
        %1997 = vmatprep.subr.mxu0 0.0
        %1998 = vmatpush1.msra.mxu0 0.0
        %1999 = vmatprep.subr.mxu0 0.0
        %2000 = vmatpush1.msra.mxu0 0.0
        %2001 = vmatprep.subr.mxu0 0.0
        %2002 = vmatpush1.msra.mxu0 0.0
        %2003 = vmatprep.subr.mxu0 0.0
        %2004 = vmatpush1.msra.mxu0 0.0
        %2005 = vmatprep.subr.mxu0 0.0
        %2006 = vmatpush1.msra.mxu0 0.0
        %2007 = vmatprep.subr.mxu0 0.0
        %2008 = vmatpush1.msra.mxu0 0.0
        %2009 = vmatprep.subr.mxu0 0.0
        %2010 = vmatpush1.msra.mxu0 0.0
        %2011 = vmatprep.mubr.f32.mxu0 0.0
        %2012 = vmatmul.mubr.f32.gmra.mrb[0].mxu0 %v1848
        %v2013 = vpop.f32.mrb[0].mxu0
        %v2014 = vadd.f32 0.0, %v2013
        %v2015 = vpop.f32.mrb[0].mxu0
        %2016 = vmatprep.mubr.f32.mxu0 0.0
        %2017 = vmatmul.mubr.f32.gmra.mrb[0].mxu0 %v1851
        %v2018 = vpop.f32.mrb[0].mxu0
        %v2019 = vadd.f32 0.0, %v2018
        %v2020 = vpop.f32.mrb[0].mxu0
        %2021 = vmatprep.mubr.f32.mxu0 0.0
        %2022 = vmatmul.mubr.f32.gmra.mrb[0].mxu0 %v1854
        %v2023 = vpop.f32.mrb[0].mxu0
        %v2024 = vadd.f32 0.0, %v2023
        %v2025 = vpop.f32.mrb[0].mxu0
        %2026 = vmatprep.mubr.f32.mxu0 0.0
        %2027 = vmatmul.mubr.f32.gmra.mrb[0].mxu0 %v1857
        %v2028 = vpop.f32.mrb[0].mxu0
        %v2029 = vadd.f32 0.0, %v2028
        %v2030 = vpop.f32.mrb[0].mxu0
        %2031 = vmatprep.mubr.f32.mxu0 0.0
        %2032 = vmatmul.mubr.f32.gmra.mrb[0].mxu0 %v1860
        %v2033 = vpop.f32.mrb[0].mxu0
        %v2034 = vadd.f32 0.0, %v2033
        %v2035 = vpop.f32.mrb[0].mxu0
        %2036 = vmatprep.mubr.f32.mxu0 0.0
        %2037 = vmatmul.mubr.f32.gmra.mrb[0].mxu0 %v1863
        %v2038 = vpop.f32.mrb[0].mxu0
        %v2039 = vadd.f32 0.0, %v2038
        %v2040 = vpop.f32.mrb[0].mxu0
        %2041 = vmatprep.mubr.f32.mxu0 0.0
        %2042 = vmatmul.mubr.f32.gmra.mrb[0].mxu0 %v1866
        %v2043 = vpop.f32.mrb[0].mxu0
        %v2044 = vadd.f32 0.0, %v2043
        %v2045 = vpop.f32.mrb[0].mxu0
        %2046 = vmatprep.mubr.f32.mxu0 0.0
        %2047 = vmatmul.mubr.f32.gmra.mrb[0].mxu0 %v1869
        %v2048 = vpop.f32.mrb[0].mxu0
        %v2049 = vadd.f32 0.0, %v2048
        %v2050 = vpop.f32.mrb[0].mxu0
        %2051 = vmatprep.mubr.f32.mxu0 0.0
        %2052 = vmatmul.mubr.f32.gmra.mrb[0].mxu0 %v1872
        %v2053 = vpop.f32.mrb[0].mxu0
        %v2054 = vadd.f32 0.0, %v2053
        %v2055 = vpop.f32.mrb[0].mxu0
        %2056 = vmatprep.mubr.f32.mxu0 0.0
        %2057 = vmatmul.mubr.f32.gmra.mrb[0].mxu0 %v1875
        %v2058 = vpop.f32.mrb[0].mxu0
        %v2059 = vadd.f32 0.0, %v2058
        %v2060 = vpop.f32.mrb[0].mxu0
        %2061 = vmatprep.mubr.f32.mxu0 0.0
        %2062 = vmatmul.mubr.f32.gmra.mrb[0].mxu0 %v1878
        %v2063 = vpop.f32.mrb[0].mxu0
        %v2064 = vadd.f32 0.0, %v2063
        %v2065 = vpop.f32.mrb[0].mxu0
        %2066 = vmatprep.mubr.f32.mxu0 0.0
        %2067 = vmatmul.mubr.f32.gmra.mrb[0].mxu0 %v1881
        %v2068 = vpop.f32.mrb[0].mxu0
        %v2069 = vadd.f32 0.0, %v2068
        %v2070 = vpop.f32.mrb[0].mxu0
        %2071 = vmatprep.mubr.f32.mxu0 0.0
        %2072 = vmatmul.mubr.f32.gmra.mrb[0].mxu0 %v1884
        %v2073 = vpop.f32.mrb[0].mxu0
        %v2074 = vadd.f32 0.0, %v2073
        %v2075 = vpop.f32.mrb[0].mxu0
        %2076 = vmatprep.mubr.f32.mxu0 0.0
        %2077 = vmatmul.mubr.f32.gmra.mrb[0].mxu0 %v1887
        %v2078 = vpop.f32.mrb[0].mxu0
        %v2079 = vadd.f32 0.0, %v2078
        %v2080 = vpop.f32.mrb[0].mxu0
        %2081 = vmatprep.mubr.f32.mxu0 0.0
        %2082 = vmatmul.mubr.f32.gmra.mrb[0].mxu0 %v1890
        %v2083 = vpop.f32.mrb[0].mxu0
        %v2084 = vadd.f32 0.0, %v2083
        %v2085 = vpop.f32.mrb[0].mxu0
        %2086 = vmatprep.mubr.f32.mxu0 0.0
        %2087 = vmatmul.mubr.f32.gmra.mrb[0].mxu0 %v1893
        %v2088 = vpop.f32.mrb[0].mxu0
        %v2089 = vadd.f32 0.0, %v2088
        %v2090 = vpop.f32.mrb[0].mxu0
        %2091 = vmatprep.mubr.f32.mxu0 0.0
        %2092 = vmatmul.mubr.f32.gmra.mrb[0].mxu0 %v1896
        %v2093 = vpop.f32.mrb[0].mxu0
        %v2094 = vadd.f32 0.0, %v2093
        %v2095 = vpop.f32.mrb[0].mxu0
        %2096 = vmatprep.mubr.f32.mxu0 0.0
        %2097 = vmatmul.mubr.f32.gmra.mrb[0].mxu0 %v1899
        %v2098 = vpop.f32.mrb[0].mxu0
        %v2099 = vadd.f32 0.0, %v2098
        %v2100 = vpop.f32.mrb[0].mxu0
        %2101 = vmatprep.mubr.f32.mxu0 0.0
        %2102 = vmatmul.mubr.f32.gmra.mrb[0].mxu0 %v1902
        %v2103 = vpop.f32.mrb[0].mxu0
        %v2104 = vadd.f32 0.0, %v2103
        %v2105 = vpop.f32.mrb[0].mxu0
        %2106 = vmatprep.mubr.f32.mxu0 0.0
        %2107 = vmatmul.mubr.f32.gmra.mrb[0].mxu0 %v1905
        %v2108 = vpop.f32.mrb[0].mxu0
        %v2109 = vadd.f32 0.0, %v2108
        %v2110 = vpop.f32.mrb[0].mxu0
        %2111 = vmatprep.mubr.f32.mxu0 0.0
        %2112 = vmatmul.mubr.f32.gmra.mrb[0].mxu0 %v1908
        %v2113 = vpop.f32.mrb[0].mxu0
        %v2114 = vadd.f32 0.0, %v2113
        %v2115 = vpop.f32.mrb[0].mxu0
        %2116 = vmatprep.mubr.f32.mxu0 0.0
        %2117 = vmatmul.mubr.f32.gmra.mrb[0].mxu0 %v1911
        %v2118 = vpop.f32.mrb[0].mxu0
        %v2119 = vadd.f32 0.0, %v2118
        %v2120 = vpop.f32.mrb[0].mxu0
        %2121 = vmatprep.mubr.f32.mxu0 0.0
        %2122 = vmatmul.mubr.f32.gmra.mrb[0].mxu0 %v1914
        %v2123 = vpop.f32.mrb[0].mxu0
        %v2124 = vadd.f32 0.0, %v2123
        %v2125 = vpop.f32.mrb[0].mxu0
        %2126 = vmatprep.mubr.f32.mxu0 0.0
        %2127 = vmatmul.mubr.f32.gmra.mrb[0].mxu0 %v1917
        %v2128 = vpop.f32.mrb[0].mxu0
        %v2129 = vadd.f32 0.0, %v2128
        %v2130 = vpop.f32.mrb[0].mxu0
        %2131 = vmatprep.mubr.f32.mxu0 0.0
        %2132 = vmatmul.mubr.f32.gmra.mrb[0].mxu0 %v1920
        %v2133 = vpop.f32.mrb[0].mxu0
        %v2134 = vadd.f32 0.0, %v2133
        %v2135 = vpop.f32.mrb[0].mxu0
        %2136 = vmatprep.mubr.f32.mxu0 0.0
        %2137 = vmatmul.mubr.f32.gmra.mrb[0].mxu0 %v1923
        %v2138 = vpop.f32.mrb[0].mxu0
        %v2139 = vadd.f32 0.0, %v2138
        %v2140 = vpop.f32.mrb[0].mxu0
        %2141 = vmatprep.mubr.f32.mxu0 0.0
        %2142 = vmatmul.mubr.f32.gmra.mrb[0].mxu0 %v1926
        %v2143 = vpop.f32.mrb[0].mxu0
        %v2144 = vadd.f32 0.0, %v2143
        %v2145 = vpop.f32.mrb[0].mxu0
        %2146 = vmatprep.mubr.f32.mxu0 0.0
        %2147 = vmatmul.mubr.f32.gmra.mrb[0].mxu0 %v1929
        %v2148 = vpop.f32.mrb[0].mxu0
        %v2149 = vadd.f32 0.0, %v2148
        %v2150 = vpop.f32.mrb[0].mxu0
        %2151 = vmatprep.mubr.f32.mxu0 0.0
        %2152 = vmatmul.mubr.f32.gmra.mrb[0].mxu0 %v1932
        %v2153 = vpop.f32.mrb[0].mxu0
        %v2154 = vadd.f32 0.0, %v2153
        %v2155 = vpop.f32.mrb[0].mxu0
        %2156 = vmatprep.mubr.f32.mxu0 0.0
        %2157 = vmatmul.mubr.f32.gmra.mrb[0].mxu0 %v1935
        %v2158 = vpop.f32.mrb[0].mxu0
        %v2159 = vadd.f32 0.0, %v2158
        %v2160 = vpop.f32.mrb[0].mxu0
        %2161 = vmatprep.mubr.f32.mxu0 0.0
        %2162 = vmatmul.mubr.f32.gmra.mrb[0].mxu0 %v1938
        %v2163 = vpop.f32.mrb[0].mxu0
        %v2164 = vadd.f32 0.0, %v2163
        %v2165 = vpop.f32.mrb[0].mxu0
        %2166 = vmatprep.mubr.f32.mxu0 0.0
        %2167 = vmatmul.mubr.f32.gmra.mrb[0].mxu0 %v1941
        %v2168 = vpop.f32.mrb[0].mxu0
        %v2169 = vadd.f32 0.0, %v2168
        %v2170 = vpop.f32.mrb[0].mxu0
        %2171 = vdwg.mxu0
        %v2172 = vld [vmem:[#allocation3] sm:$0x1]
        %s2173 = vtos %v2172
        %v2174 = vstv %s2173
        %v2175 = vmul.f32 %v2014, %v2174
        %v2176 = vmul.f32 %v2019, %v2174
        %v2177 = vmul.f32 %v2024, %v2174
        %v2178 = vmul.f32 %v2029, %v2174
        %v2179 = vmul.f32 %v2034, %v2174
        %v2180 = vmul.f32 %v2039, %v2174
        %v2181 = vmul.f32 %v2044, %v2174
        %v2182 = vmul.f32 %v2049, %v2174
        %v2183 = vmul.f32 %v2054, %v2174
        %v2184 = vmul.f32 %v2059, %v2174
        %v2185 = vmul.f32 %v2064, %v2174
        %v2186 = vmul.f32 %v2069, %v2174
        %v2187 = vmul.f32 %v2074, %v2174
        %v2188 = vmul.f32 %v2079, %v2174
        %v2189 = vmul.f32 %v2084, %v2174
        %v2190 = vmul.f32 %v2089, %v2174
        %v2191 = vmul.f32 %v2094, %v2174
        %v2192 = vmul.f32 %v2099, %v2174
        %v2193 = vmul.f32 %v2104, %v2174
        %v2194 = vmul.f32 %v2109, %v2174
        %v2195 = vmul.f32 %v2114, %v2174
        %v2196 = vmul.f32 %v2119, %v2174
        %v2197 = vmul.f32 %v2124, %v2174
        %v2198 = vmul.f32 %v2129, %v2174
        %v2199 = vmul.f32 %v2134, %v2174
        %v2200 = vmul.f32 %v2139, %v2174
        %v2201 = vmul.f32 %v2144, %v2174
        %v2202 = vmul.f32 %v2149, %v2174
        %v2203 = vmul.f32 %v2154, %v2174
        %v2204 = vmul.f32 %v2159, %v2174
        %v2205 = vmul.f32 %v2164, %v2174
        %v2206 = vmul.f32 %v2169, %v2174
        %v2207 = vld [vmem:[%s3] sm:$0x1]
        %v2209 = vlaneseq
        %v2210 = vshrl.u32 %v2209, 7
        %v2211 = vsub.s32 0, %v2210
        %v2212 = vrot.slane %v2207, %v2211
        %v2214 = vadd.f32 %v2175, %v2212
        %v2215 = vadd.f32 %v2176, %v2212
        %v2216 = vadd.f32 %v2177, %v2212
        %v2217 = vadd.f32 %v2178, %v2212
        %v2218 = vadd.f32 %v2179, %v2212
        %v2219 = vadd.f32 %v2180, %v2212
        %v2220 = vadd.f32 %v2181, %v2212
        %v2221 = vadd.f32 %v2182, %v2212
        %v2222 = vadd.f32 %v2183, %v2212
        %v2223 = vadd.f32 %v2184, %v2212
        %v2224 = vadd.f32 %v2185, %v2212
        %v2225 = vadd.f32 %v2186, %v2212
        %v2226 = vadd.f32 %v2187, %v2212
        %v2227 = vadd.f32 %v2188, %v2212
        %v2228 = vadd.f32 %v2189, %v2212
        %v2229 = vadd.f32 %v2190, %v2212
        %v2230 = vadd.f32 %v2191, %v2212
        %v2231 = vadd.f32 %v2192, %v2212
        %v2232 = vadd.f32 %v2193, %v2212
        %v2233 = vadd.f32 %v2194, %v2212
        %v2234 = vadd.f32 %v2195, %v2212
        %v2235 = vadd.f32 %v2196, %v2212
        %v2236 = vadd.f32 %v2197, %v2212
        %v2237 = vadd.f32 %v2198, %v2212
        %v2238 = vadd.f32 %v2199, %v2212
        %v2239 = vadd.f32 %v2200, %v2212
        %v2240 = vadd.f32 %v2201, %v2212
        %v2241 = vadd.f32 %v2202, %v2212
        %v2242 = vadd.f32 %v2203, %v2212
        %v2243 = vadd.f32 %v2204, %v2212
        %v2244 = vadd.f32 %v2205, %v2212
        %v2245 = vadd.f32 %v2206, %v2212
        %2246 = vst [vmem:[%s192] sm:$0xff] %v2214
        %2247 = vst [vmem:[%s192 + $0x8] sm:$0xff] %v2215
        %2248 = vst [vmem:[%s192 + $0x10] sm:$0xff] %v2216
        %2249 = vst [vmem:[%s192 + $0x18] sm:$0xff] %v2217
        %2250 = vst [vmem:[%s192 + $0x20] sm:$0xff] %v2218
        %2251 = vst [vmem:[%s192 + $0x28] sm:$0xff] %v2219
        %2252 = vst [vmem:[%s192 + $0x30] sm:$0xff] %v2220
        %2253 = vst [vmem:[%s192 + $0x38] sm:$0xff] %v2221
        %2254 = vst [vmem:[%s192 + $0x40] sm:$0xff] %v2222
        %2255 = vst [vmem:[%s192 + $0x48] sm:$0xff] %v2223
        %2256 = vst [vmem:[%s192 + $0x50] sm:$0xff] %v2224
        %2257 = vst [vmem:[%s192 + $0x58] sm:$0xff] %v2225
        %2258 = vst [vmem:[%s192 + $0x60] sm:$0xff] %v2226
        %2259 = vst [vmem:[%s192 + $0x68] sm:$0xff] %v2227
        %2260 = vst [vmem:[%s192 + $0x70] sm:$0xff] %v2228
        %2261 = vst [vmem:[%s192 + $0x78] sm:$0xff] %v2229
        %2262 = vst [vmem:[%s192 + $0x80] sm:$0xff] %v2230
        %2263 = vst [vmem:[%s192 + $0x88] sm:$0xff] %v2231
        %2264 = vst [vmem:[%s192 + $0x90] sm:$0xff] %v2232
        %2265 = vst [vmem:[%s192 + $0x98] sm:$0xff] %v2233
        %2266 = vst [vmem:[%s192 + $0xa0] sm:$0xff] %v2234
        %2267 = vst [vmem:[%s192 + $0xa8] sm:$0xff] %v2235
        %2268 = vst [vmem:[%s192 + $0xb0] sm:$0xff] %v2236
        %2269 = vst [vmem:[%s192 + $0xb8] sm:$0xff] %v2237
        %2270 = vst [vmem:[%s192 + $0xc0] sm:$0xff] %v2238
        %2271 = vst [vmem:[%s192 + $0xc8] sm:$0xff] %v2239
        %2272 = vst [vmem:[%s192 + $0xd0] sm:$0xff] %v2240
        %2273 = vst [vmem:[%s192 + $0xd8] sm:$0xff] %v2241
        %2274 = vst [vmem:[%s192 + $0xe0] sm:$0xff] %v2242
        %2275 = vst [vmem:[%s192 + $0xe8] sm:$0xff] %v2243
        %2276 = vst [vmem:[%s192 + $0xf0] sm:$0xff] %v2244
        %2277 = vst [vmem:[%s192 + $0xf8] sm:$0xff] %v2245
        %s2278 = sand.u32 %s117, 1
        %s2279 = scalar_lea.sflag [#allocation5], %s2278
        %s2280 = sand.u32 %s117, 1
        %s2281 = smul.addr %s2280, 256
        %s2282 = scalar_lea.vmem [#allocation4], %s2281
        // Predicated region
        $region37: #{spectral_norm_conv2d_forward.3} parent=35 // pred_check
          %p2283 = pneg %p127
        $region38: #{spectral_norm_conv2d_forward.3} parent=35 // pred_check_branch
          %2285 = sbr.rel (%p2283) target = $region40
        $region39: #{spectral_norm_conv2d_forward.3} parent=35 // pred_region
          %s2287 = ssub.s32 4096, 4096
          %2288 = vsyncadd %s2279, %s2287
          %s2289 = smul.addr %s20, 32
          %s2290 = smul.addr %s2289, 128
          %s2291 = scalar_lea.hbm %s4, %s2290
          %s2292 = sshll.u32 %s2282, 4
          %s2293 = int_to_ptr.vmem [resolvable:$true] %s2292
          %2298 = dma.vmem_to_hbm [thread:$0]  %s2293, 4096, %s2291, %s2279, 128, 128, 8
        $region40: #{spectral_norm_conv2d_forward.3} parent=35 // pred_fallthru
          _
      $region36: #{spectral_norm_conv2d_forward.3} parent=5 // pred_fallthru
        _
      %p2299 = scmp.le.s32.totalorder 2, %s15
      // Predicated region
      $region41: #{spectral_norm_conv2d_forward.3} parent=5 // pred_check
        %p2300 = pneg %p2299
      $region42: #{spectral_norm_conv2d_forward.3} parent=5 // pred_check_branch
        %2302 = sbr.rel (%p2300) target = $region44
      $region43: #{spectral_norm_conv2d_forward.3} parent=5 // pred_region
        %s2303 = ssub.s32 %s15, 2
        // Predicated region
        $region45: #{spectral_norm_conv2d_forward.3} parent=43 // pred_check
          %p2304 = pneg %p133
        $region46: #{spectral_norm_conv2d_forward.3} parent=43 // pred_check_branch
          %2306 = sbr.rel (%p2304) target = $region48
        $region47: #{spectral_norm_conv2d_forward.3} parent=43 // pred_region
          %s2307 = sand.u32 %s118, 1
          %s2308 = scalar_lea.sflag [#allocation5], %s2307
          %s2309 = sand.u32 %s118, 1
          %s2310 = smul.addr %s2309, 256
          %s2311 = scalar_lea.vmem [#allocation4], %s2310
          %2312 = dma.done %s2308, 4096
        $region48: #{spectral_norm_conv2d_forward.3} parent=43 // pred_fallthru
          _
      $region44: #{spectral_norm_conv2d_forward.3} parent=5 // pred_fallthru
        _
    $region6: #{spectral_norm_conv2d_forward.3} parent=1 // loop_footer
      %s19 = sadd.s32 1, %s15
    $region7: #{spectral_norm_conv2d_forward.3} parent=1 // loop_footer_branch
      %14 = sbr.rel target = $region3
    $region8: #{spectral_norm_conv2d_forward.3} parent=1 // loop_exit
      _
    %2313 = vsyncpa [#allocation5], 1
    %s2314 = scalar_lea.sflag [#allocation5], 1
    %2315 = vsyncpa %s2314, 1

</llo_original>
